<compile_context>
chip_gen: v5e
topology: v5e:2x2
jax: 0.10.0
libtpu: 0.0.40
codegen_flags: <defaults>
</compile_context>

<pallas_src>
import jax
import jax.numpy as jnp
from jax.experimental import pallas as pl
from jax.experimental.pallas import tpu as pltpu

# --- small ESM-2-like configuration (synthetic) ------------------------------
B, S = 2, 8          # batch, sequence length
D = 32               # hidden size
H = 2                # attention heads
DH = D // H          # head dim
F = 64               # FFN intermediate size
L = 2                # number of encoder layers
V = 33               # ESM-2 vocab size
LN_EPS = 1e-5
NVEC = 9             # packed per-layer D-wide vector params (LN g/b + biases)
BS = B * S           # batch folded into sublanes


def _layernorm(x, g, b):
    mu = jnp.mean(x, axis=-1, keepdims=True)
    var = jnp.mean(jnp.square(x - mu), axis=-1, keepdims=True)
    return (x - mu) * jax.lax.rsqrt(var + LN_EPS) * g + b


def esm2_encoder_kernel(x_ref, cos_ref, sin_ref, rot_ref, mask_ref,
                        wqkvo_ref, wi_ref, wo2_ref, vec_ref, bi_ref, fin_ref,
                        out_ref):
    # Single grid step: all B*S rows on the sublane axis, all L layers fused.
    h = x_ref[...]                    # (B*S, D) f32 embeddings
    cos = cos_ref[...]                # (B*S, D) bf16 rotary cos (tiled)
    sin = sin_ref[...]                # (B*S, D) bf16 rotary sin (tiled)
    rot = rot_ref[...]                # (D, D)  bf16 block-diag signed half-rotation
    mask = mask_ref[...]              # (B*S, B*S) f32 block-diagonal attn mask

    for l in range(L):                # static unrolled layer loop (L=2)
        # TODO(synk): at real ESM-2 depth (L=33, D=1280, F=5120) switch to
        # lax.fori_loop over layers with double-buffered per-layer weight DMA
        # (pl.ANY HBM refs) and an explicit vmem_limit_bytes; full residency
        # here is toy-size only (esp. v7x's 64 MiB VMEM).
        vec = vec_ref[l]              # (NVEC, D) f32 packed LN params + biases
        ln1_g, ln1_b = vec[0:1, :], vec[1:2, :]
        bq, bk = vec[2:3, :], vec[3:4, :]
        bv, bo = vec[4:5, :], vec[5:6, :]
        ln2_g, ln2_b = vec[6:7, :], vec[7:8, :]
        bo2 = vec[8:9, :]
        bi = bi_ref[l]                # (1, F) f32
        wl = wqkvo_ref[l]             # (4, D, D) bf16: wq|wk|wv|wo

        # ---------------- self-attention block (pre-LN, rotary) ------------
        x_ln = _layernorm(h, ln1_g, ln1_b)
        xb = x_ln.astype(jnp.bfloat16)
        # 1/sqrt(DH) query scale is folded into wq AND bq in the wrapper.
        q = jnp.dot(xb, wl[0], preferred_element_type=jnp.float32) + bq
        k = jnp.dot(xb, wl[1], preferred_element_type=jnp.float32) + bk
        v = jnp.dot(xb, wl[2], preferred_element_type=jnp.float32) + bv

        # Rotary with bf16 operands: rotate_half is a single-pass bf16 MXU
        # matmul against a constant signed permutation (no lane shuffles).
        qb = q.astype(jnp.bfloat16)
        kb = k.astype(jnp.bfloat16)
        q_rot = (qb * cos + jnp.dot(qb, rot, preferred_element_type=jnp.float32)
                 * sin).astype(jnp.bfloat16)
        k_rot = (kb * cos + jnp.dot(kb, rot, preferred_element_type=jnp.float32)
                 * sin).astype(jnp.bfloat16)
        kT = k_rot.T                  # one transpose/layer, hoisted out of head loop
        vb = v.astype(jnp.bfloat16)
        wo = wl[3]                    # (D, D) bf16

        attn = None
        for hh in range(H):           # static per-head loop: pure lane slices
            lo = hh * DH
            s = jnp.dot(q_rot[:, lo:lo + DH], kT[lo:lo + DH, :],
                        preferred_element_type=jnp.float32)      # (BS, BS)
            s = s + mask              # block-diag: no cross-sequence attention
            s = s - jnp.max(s, axis=-1, keepdims=True)
            e = jnp.exp(s)
            p = e * pl.reciprocal(jnp.sum(e, axis=-1, keepdims=True), approx=True)
            ctx = jnp.dot(p.astype(jnp.bfloat16), vb[:, lo:lo + DH],
                          preferred_element_type=jnp.float32)    # (BS, DH)
            part = jnp.dot(ctx.astype(jnp.bfloat16), wo[lo:lo + DH, :],
                           preferred_element_type=jnp.float32)   # (BS, D)
            attn = part if attn is None else attn + part
        attn_out = attn + bo + h      # output bias + residual

        # ---------------- feed-forward block (pre-LN, GELU) ----------------
        x_ln2 = _layernorm(attn_out, ln2_g, ln2_b).astype(jnp.bfloat16)
        inter = jnp.dot(x_ln2, wi_ref[l], preferred_element_type=jnp.float32) + bi
        # TODO(synk): HF ESM-2 uses exact erf-GELU; tanh-approx GELU keeps the
        # transcendental on the guaranteed EUP lowering path.
        inter = jax.nn.gelu(inter, approximate=True)
        ffn = jnp.dot(inter.astype(jnp.bfloat16), wo2_ref[l],
                      preferred_element_type=jnp.float32) + bo2
        h = ffn + attn_out            # residual

    # final emb_layer_norm_after; single full-block store
    fin = fin_ref[...]
    out_ref[...] = _layernorm(h, fin[0:1, :], fin[1:2, :])


def _full_spec(shape):
    nd = len(shape)
    return pl.BlockSpec(shape, lambda i, _nd=nd: (0,) * _nd)


def esm2_last_hidden_state(token_ids, p):
    # Embedding gather (glue, plain JAX).  ESM-2 token-dropout rescaling with
    # no <mask> tokens present reduces to a constant factor (1 - 0.15*0.8).
    # TODO(synk): real ESM-2 rescales per-sequence by the observed mask ratio
    # and applies an attention padding mask; not needed for these inputs.
    emb = p['embedding'][token_ids].astype(jnp.float32) * (1.0 - 0.15 * 0.8)
    emb2d = emb.reshape(BS, D)        # fold batch into the sublane axis

    scale = DH ** -0.5

    # Rotary tables tiled across heads + batch rows, precomputed in bf16 so the
    # in-kernel rotate_half matmul is a single bf16 MXU pass.
    inv_freq = 1.0 / (10000.0 ** (jnp.arange(0, DH, 2, dtype=jnp.float32) / DH))
    freqs = jnp.arange(S, dtype=jnp.float32)[:, None] * inv_freq[None, :]
    ang = jnp.concatenate([freqs, freqs], axis=-1)              # (S, DH)
    cosd = jnp.tile(jnp.cos(ang), (B, H)).astype(jnp.bfloat16)  # (B*S, D)
    sind = jnp.tile(jnp.sin(ang), (B, H)).astype(jnp.bfloat16)  # (B*S, D)

    # Signed half-rotation matrix so that rotate_half(x) == x @ rot (per head).
    half = DH // 2
    r = jnp.zeros((DH, DH), jnp.float32)
    r = r.at[half:, :half].set(-jnp.eye(half, dtype=jnp.float32))
    r = r.at[:half, half:].set(jnp.eye(half, dtype=jnp.float32))
    rot = jnp.kron(jnp.eye(H, dtype=jnp.float32), r).astype(jnp.bfloat16)

    # Pack weights: 1/sqrt(DH) folded into wq AND bq (ESM scales the biased
    # projection); q|k|v|o stacked into one bf16 slab per layer.
    wqkvo = jnp.stack([p['wq'] * scale, p['wk'], p['wv'], p['wo']],
                      axis=1).astype(jnp.bfloat16)              # (L, 4, D, D)
    wi = p['wi'].astype(jnp.bfloat16)                           # (L, D, F)
    wo2 = p['wo2'].astype(jnp.bfloat16)                         # (L, F, D)

    vec = jnp.concatenate(
        [p['ln1_g'], p['ln1_b'],
         p['bq'] * scale, p['bk'], p['bv'], p['bo'],
         p['ln2_g'], p['ln2_b'], p['bo2']], axis=1)             # (L, NVEC, D) f32
    bi = p['bi']                                                # (L, 1, F) f32
    fin = jnp.concatenate([p['fin_g'], p['fin_b']], axis=0)     # (2, D) f32

    # Block-diagonal additive attention mask: with batch folded into sublanes,
    # rows may only attend within their own sequence.
    bid = jnp.repeat(jnp.arange(B, dtype=jnp.int32), S)
    mask = jnp.where(bid[:, None] == bid[None, :], 0.0, -1e30).astype(jnp.float32)

    out2d = pl.pallas_call(
        esm2_encoder_kernel,
        out_shape=jax.ShapeDtypeStruct((BS, D), jnp.float32),
        grid=(1,),                    # single step: everything VMEM-resident
        in_specs=[
            _full_spec((BS, D)),                       # embeddings (batch folded)
            _full_spec((BS, D)), _full_spec((BS, D)),  # cos, sin (bf16)
            _full_spec((D, D)),                        # rotation matrix (bf16)
            _full_spec((BS, BS)),                      # block-diag attn mask
            _full_spec((L, 4, D, D)),                  # wq|wk|wv|wo (bf16)
            _full_spec((L, D, F)),                     # wi (bf16)
            _full_spec((L, F, D)),                     # wo2 (bf16)
            _full_spec((L, NVEC, D)),                  # LN params + biases (f32)
            _full_spec((L, 1, F)),                     # FFN intermediate bias
            _full_spec((2, D)),                        # final LN g|b
        ],
        out_specs=pl.BlockSpec((BS, D), lambda i: (0, 0)),
        compiler_params=pltpu.CompilerParams(
            dimension_semantics=("arbitrary",)),
        # TODO(synk): at real ESM-2 sizes add a row/batch grid axis with
        # pltpu.CORE_PARALLEL for v7x's 2 TCs, stream per-layer weights via
        # buffered HBM specs, and set vmem_limit_bytes explicitly.
    )(emb2d, cosd, sind, rot, mask, wqkvo, wi, wo2, vec, bi, fin)

    return out2d.reshape(B, S, D)


def init_params(key):
    ks = jax.random.split(key, 8)
    s = 0.02
    return {
        'embedding': s * jax.random.normal(ks[0], (V, D), jnp.float32),
        'ln1_g': jnp.ones((L, 1, D), jnp.float32),
        'ln1_b': jnp.zeros((L, 1, D), jnp.float32),
        'wq': s * jax.random.normal(ks[1], (L, D, D), jnp.float32),
        'bq': jnp.zeros((L, 1, D), jnp.float32),
        'wk': s * jax.random.normal(ks[2], (L, D, D), jnp.float32),
        'bk': jnp.zeros((L, 1, D), jnp.float32),
        'wv': s * jax.random.normal(ks[3], (L, D, D), jnp.float32),
        'bv': jnp.zeros((L, 1, D), jnp.float32),
        'wo': s * jax.random.normal(ks[4], (L, D, D), jnp.float32),
        'bo': jnp.zeros((L, 1, D), jnp.float32),
        'ln2_g': jnp.ones((L, 1, D), jnp.float32),
        'ln2_b': jnp.zeros((L, 1, D), jnp.float32),
        'wi': s * jax.random.normal(ks[5], (L, D, F), jnp.float32),
        'bi': jnp.zeros((L, 1, F), jnp.float32),
        'wo2': s * jax.random.normal(ks[6], (L, F, D), jnp.float32),
        'bo2': jnp.zeros((L, 1, D), jnp.float32),
        'fin_g': jnp.ones((1, D), jnp.float32),
        'fin_b': jnp.zeros((1, D), jnp.float32),
    }


if __name__ == "__main__":
    key = jax.random.PRNGKey(0)
    pkey, dkey = jax.random.split(key)
    params = init_params(pkey)
    # token ids in the amino-acid range (no <mask>/<pad> tokens)
    token_ids = jax.random.randint(dkey, (B, S), 4, 24, dtype=jnp.int32)

    out = esm2_last_hidden_state(token_ids, params)
    out = jax.block_until_ready(out)
    assert out.shape == (B, S, D) and out.dtype == jnp.float32
    assert bool(jnp.all(jnp.isfinite(out)))
    print("KERNEL_OK")
</pallas_src>

<mosaic_0001>
module attributes {stable_mosaic.version = 11 : i64} {
  func.func @esm2_encoder_kernel(%arg0: i32, %arg1: memref<16x32xf32, #tpu.memory_space<vmem>>, %arg2: memref<16x32xbf16, #tpu.memory_space<vmem>>, %arg3: memref<16x32xbf16, #tpu.memory_space<vmem>>, %arg4: memref<32x32xbf16, #tpu.memory_space<vmem>>, %arg5: memref<16x16xf32, #tpu.memory_space<vmem>>, %arg6: memref<2x4x32x32xbf16, #tpu.memory_space<vmem>>, %arg7: memref<2x32x64xbf16, #tpu.memory_space<vmem>>, %arg8: memref<2x64x32xbf16, #tpu.memory_space<vmem>>, %arg9: memref<2x9x32xf32, #tpu.memory_space<vmem>>, %arg10: memref<2x1x64xf32, #tpu.memory_space<vmem>>, %arg11: memref<2x32xf32, #tpu.memory_space<vmem>>, %arg12: memref<16x32xf32, #tpu.memory_space<vmem>>) attributes {dimension_semantics = [#tpu.dimension_semantics<arbitrary>], iteration_bounds = array<i64: 1>, scalar_prefetch = 0 : i64, scratch_operands = 0 : i64, tpu.core_type = #tpu.core_type<tc>, window_params = [{pipeline_mode = #tpu.pipeline_mode<synchronous>, transform_indices = @transform_0, window_bounds = array<i64: 16, 32>}, {pipeline_mode = #tpu.pipeline_mode<synchronous>, transform_indices = @transform_1, window_bounds = array<i64: 16, 32>}, {pipeline_mode = #tpu.pipeline_mode<synchronous>, transform_indices = @transform_2, window_bounds = array<i64: 16, 32>}, {pipeline_mode = #tpu.pipeline_mode<synchronous>, transform_indices = @transform_3, window_bounds = array<i64: 32, 32>}, {pipeline_mode = #tpu.pipeline_mode<synchronous>, transform_indices = @transform_4, window_bounds = array<i64: 16, 16>}, {pipeline_mode = #tpu.pipeline_mode<synchronous>, transform_indices = @transform_5, window_bounds = array<i64: 2, 4, 32, 32>}, {pipeline_mode = #tpu.pipeline_mode<synchronous>, transform_indices = @transform_6, window_bounds = array<i64: 2, 32, 64>}, {pipeline_mode = #tpu.pipeline_mode<synchronous>, transform_indices = @transform_7, window_bounds = array<i64: 2, 64, 32>}, {pipeline_mode = #tpu.pipeline_mode<synchronous>, transform_indices = @transform_8, window_bounds = array<i64: 2, 9, 32>}, {pipeline_mode = #tpu.pipeline_mode<synchronous>, transform_indices = @transform_9, window_bounds = array<i64: 2, 1, 64>}, {pipeline_mode = #tpu.pipeline_mode<synchronous>, transform_indices = @transform_10, window_bounds = array<i64: 2, 32>}, {pipeline_mode = #tpu.pipeline_mode<synchronous>, transform_indices = @transform_11, window_bounds = array<i64: 16, 32>}]} {
    %c0 = arith.constant 0 : index
    %c0_0 = arith.constant 0 : index
    %0 = vector.load %arg1[%c0, %c0_0] : memref<16x32xf32, #tpu.memory_space<vmem>>, vector<16x32xf32>
    %c0_1 = arith.constant 0 : index
    %c0_2 = arith.constant 0 : index
    %1 = vector.load %arg2[%c0_1, %c0_2] : memref<16x32xbf16, #tpu.memory_space<vmem>>, vector<16x32xbf16>
    %c0_3 = arith.constant 0 : index
    %c0_4 = arith.constant 0 : index
    %2 = vector.load %arg3[%c0_3, %c0_4] : memref<16x32xbf16, #tpu.memory_space<vmem>>, vector<16x32xbf16>
    %c0_5 = arith.constant 0 : index
    %c0_6 = arith.constant 0 : index
    %3 = vector.load %arg4[%c0_5, %c0_6] : memref<32x32xbf16, #tpu.memory_space<vmem>>, vector<32x32xbf16>
    %c0_7 = arith.constant 0 : index
    %c0_8 = arith.constant 0 : index
    %4 = vector.load %arg5[%c0_7, %c0_8] : memref<16x16xf32, #tpu.memory_space<vmem>>, vector<16x16xf32>
    %c0_9 = arith.constant 0 : index
    %c0_10 = arith.constant 0 : index
    %c0_11 = arith.constant 0 : index
    %5 = vector.load %arg9[%c0_9, %c0_10, %c0_11] : memref<2x9x32xf32, #tpu.memory_space<vmem>>, vector<1x9x32xf32>
    %6 = vector.shape_cast %5 : vector<1x9x32xf32> to vector<9x32xf32>
    %7 = vector.extract_strided_slice %6 {offsets = [0, 0], sizes = [1, 32], strides = [1, 1]} : vector<9x32xf32> to vector<1x32xf32>
    %8 = vector.extract_strided_slice %6 {offsets = [1, 0], sizes = [1, 32], strides = [1, 1]} : vector<9x32xf32> to vector<1x32xf32>
    %9 = vector.extract_strided_slice %6 {offsets = [2, 0], sizes = [1, 32], strides = [1, 1]} : vector<9x32xf32> to vector<1x32xf32>
    %10 = vector.extract_strided_slice %6 {offsets = [3, 0], sizes = [1, 32], strides = [1, 1]} : vector<9x32xf32> to vector<1x32xf32>
    %11 = vector.extract_strided_slice %6 {offsets = [4, 0], sizes = [1, 32], strides = [1, 1]} : vector<9x32xf32> to vector<1x32xf32>
    %12 = vector.extract_strided_slice %6 {offsets = [5, 0], sizes = [1, 32], strides = [1, 1]} : vector<9x32xf32> to vector<1x32xf32>
    %13 = vector.extract_strided_slice %6 {offsets = [6, 0], sizes = [1, 32], strides = [1, 1]} : vector<9x32xf32> to vector<1x32xf32>
    %14 = vector.extract_strided_slice %6 {offsets = [7, 0], sizes = [1, 32], strides = [1, 1]} : vector<9x32xf32> to vector<1x32xf32>
    %15 = vector.extract_strided_slice %6 {offsets = [8, 0], sizes = [1, 32], strides = [1, 1]} : vector<9x32xf32> to vector<1x32xf32>
    %c0_12 = arith.constant 0 : index
    %c0_13 = arith.constant 0 : index
    %c0_14 = arith.constant 0 : index
    %16 = vector.load %arg10[%c0_12, %c0_13, %c0_14] : memref<2x1x64xf32, #tpu.memory_space<vmem>>, vector<1x1x64xf32>
    %17 = vector.shape_cast %16 : vector<1x1x64xf32> to vector<1x64xf32>
    %c0_15 = arith.constant 0 : index
    %c0_16 = arith.constant 0 : index
    %c0_17 = arith.constant 0 : index
    %c0_18 = arith.constant 0 : index
    %18 = vector.load %arg6[%c0_15, %c0_16, %c0_17, %c0_18] : memref<2x4x32x32xbf16, #tpu.memory_space<vmem>>, vector<1x4x32x32xbf16>
    %19 = vector.shape_cast %18 : vector<1x4x32x32xbf16> to vector<4x32x32xbf16>
    %cst = arith.constant dense<0.000000e+00> : vector<16xf32>
    %20 = vector.multi_reduction <add>, %0, %cst [1] : vector<16x32xf32> to vector<16xf32>
    %21 = vector.shape_cast %20 : vector<16xf32> to vector<16x1xf32>
    %cst_19 = arith.constant 3.200000e+01 : f32
    %22 = vector.broadcast %cst_19 : f32 to vector<16x1xf32>
    %23 = arith.divf %21, %22 : vector<16x1xf32>
    %24 = vector.broadcast %23 : vector<16x1xf32> to vector<16x32xf32>
    %25 = arith.subf %0, %24 : vector<16x32xf32>
    %26 = arith.mulf %25, %25 : vector<16x32xf32>
    %cst_20 = arith.constant dense<0.000000e+00> : vector<16xf32>
    %27 = vector.multi_reduction <add>, %26, %cst_20 [1] : vector<16x32xf32> to vector<16xf32>
    %28 = vector.shape_cast %27 : vector<16xf32> to vector<16x1xf32>
    %cst_21 = arith.constant 3.200000e+01 : f32
    %29 = vector.broadcast %cst_21 : f32 to vector<16x1xf32>
    %30 = arith.divf %28, %29 : vector<16x1xf32>
    %31 = vector.broadcast %23 : vector<16x1xf32> to vector<16x32xf32>
    %32 = arith.subf %0, %31 : vector<16x32xf32>
    %cst_22 = arith.constant 9.99999974E-6 : f32
    %33 = vector.broadcast %cst_22 : f32 to vector<16x1xf32>
    %34 = arith.addf %30, %33 : vector<16x1xf32>
    %35 = math.rsqrt %34 : vector<16x1xf32>
    %36 = vector.broadcast %35 : vector<16x1xf32> to vector<16x32xf32>
    %37 = arith.mulf %32, %36 : vector<16x32xf32>
    %38 = vector.broadcast %7 : vector<1x32xf32> to vector<16x32xf32>
    %39 = arith.mulf %37, %38 : vector<16x32xf32>
    %40 = vector.broadcast %8 : vector<1x32xf32> to vector<16x32xf32>
    %41 = arith.addf %39, %40 : vector<16x32xf32>
    %42 = arith.truncf %41 : vector<16x32xf32> to vector<16x32xbf16>
    %43 = vector.extract_strided_slice %19 {offsets = [0, 0, 0], sizes = [1, 32, 32], strides = [1, 1, 1]} : vector<4x32x32xbf16> to vector<1x32x32xbf16>
    %44 = vector.shape_cast %43 : vector<1x32x32xbf16> to vector<32x32xbf16>
    %cst_23 = arith.constant dense<0.000000e+00> : vector<16x32xf32>
    %45 = tpu.matmul %42, %44, %cst_23 {dimension_numbers = #tpu.dot_dimension_numbers<[1], [0], [0], [1], [0, 0, 1, 1], [], []>} : vector<16x32xbf16>, vector<32x32xbf16>, vector<16x32xf32> -> vector<16x32xf32>
    %46 = vector.broadcast %9 : vector<1x32xf32> to vector<16x32xf32>
    %47 = arith.addf %45, %46 : vector<16x32xf32>
    %48 = vector.extract_strided_slice %19 {offsets = [1, 0, 0], sizes = [1, 32, 32], strides = [1, 1, 1]} : vector<4x32x32xbf16> to vector<1x32x32xbf16>
    %49 = vector.shape_cast %48 : vector<1x32x32xbf16> to vector<32x32xbf16>
    %cst_24 = arith.constant dense<0.000000e+00> : vector<16x32xf32>
    %50 = tpu.matmul %42, %49, %cst_24 {dimension_numbers = #tpu.dot_dimension_numbers<[1], [0], [0], [1], [0, 0, 1, 1], [], []>} : vector<16x32xbf16>, vector<32x32xbf16>, vector<16x32xf32> -> vector<16x32xf32>
    %51 = vector.broadcast %10 : vector<1x32xf32> to vector<16x32xf32>
    %52 = arith.addf %50, %51 : vector<16x32xf32>
    %53 = vector.extract_strided_slice %19 {offsets = [2, 0, 0], sizes = [1, 32, 32], strides = [1, 1, 1]} : vector<4x32x32xbf16> to vector<1x32x32xbf16>
    %54 = vector.shape_cast %53 : vector<1x32x32xbf16> to vector<32x32xbf16>
    %cst_25 = arith.constant dense<0.000000e+00> : vector<16x32xf32>
    %55 = tpu.matmul %42, %54, %cst_25 {dimension_numbers = #tpu.dot_dimension_numbers<[1], [0], [0], [1], [0, 0, 1, 1], [], []>} : vector<16x32xbf16>, vector<32x32xbf16>, vector<16x32xf32> -> vector<16x32xf32>
    %56 = vector.broadcast %11 : vector<1x32xf32> to vector<16x32xf32>
    %57 = arith.addf %55, %56 : vector<16x32xf32>
    %58 = arith.truncf %47 : vector<16x32xf32> to vector<16x32xbf16>
    %59 = arith.truncf %52 : vector<16x32xf32> to vector<16x32xbf16>
    %60 = arith.mulf %58, %1 : vector<16x32xbf16>
    %cst_26 = arith.constant dense<0.000000e+00> : vector<16x32xf32>
    %61 = tpu.matmul %58, %3, %cst_26 {dimension_numbers = #tpu.dot_dimension_numbers<[1], [0], [0], [1], [0, 0, 1, 1], [], []>} : vector<16x32xbf16>, vector<32x32xbf16>, vector<16x32xf32> -> vector<16x32xf32>
    %62 = arith.extf %2 : vector<16x32xbf16> to vector<16x32xf32>
    %63 = arith.mulf %61, %62 : vector<16x32xf32>
    %64 = arith.extf %60 : vector<16x32xbf16> to vector<16x32xf32>
    %65 = arith.addf %64, %63 : vector<16x32xf32>
    %66 = arith.truncf %65 : vector<16x32xf32> to vector<16x32xbf16>
    %67 = arith.mulf %59, %1 : vector<16x32xbf16>
    %cst_27 = arith.constant dense<0.000000e+00> : vector<16x32xf32>
    %68 = tpu.matmul %59, %3, %cst_27 {dimension_numbers = #tpu.dot_dimension_numbers<[1], [0], [0], [1], [0, 0, 1, 1], [], []>} : vector<16x32xbf16>, vector<32x32xbf16>, vector<16x32xf32> -> vector<16x32xf32>
    %69 = arith.extf %2 : vector<16x32xbf16> to vector<16x32xf32>
    %70 = arith.mulf %68, %69 : vector<16x32xf32>
    %71 = arith.extf %67 : vector<16x32xbf16> to vector<16x32xf32>
    %72 = arith.addf %71, %70 : vector<16x32xf32>
    %73 = arith.truncf %72 : vector<16x32xf32> to vector<16x32xbf16>
    %74 = tpu.transpose %73, [1, 0] : vector<16x32xbf16> -> vector<32x16xbf16>
    %75 = arith.truncf %57 : vector<16x32xf32> to vector<16x32xbf16>
    %76 = vector.extract_strided_slice %19 {offsets = [3, 0, 0], sizes = [1, 32, 32], strides = [1, 1, 1]} : vector<4x32x32xbf16> to vector<1x32x32xbf16>
    %77 = vector.shape_cast %76 : vector<1x32x32xbf16> to vector<32x32xbf16>
    %78 = vector.extract_strided_slice %66 {offsets = [0, 0], sizes = [16, 16], strides = [1, 1]} : vector<16x32xbf16> to vector<16x16xbf16>
    %79 = vector.extract_strided_slice %74 {offsets = [0, 0], sizes = [16, 16], strides = [1, 1]} : vector<32x16xbf16> to vector<16x16xbf16>
    %cst_28 = arith.constant dense<0.000000e+00> : vector<16x16xf32>
    %80 = tpu.matmul %78, %79, %cst_28 {dimension_numbers = #tpu.dot_dimension_numbers<[1], [0], [0], [1], [0, 0, 1, 1], [], []>} : vector<16x16xbf16>, vector<16x16xbf16>, vector<16x16xf32> -> vector<16x16xf32>
    %81 = arith.addf %80, %4 : vector<16x16xf32>
    %cst_29 = arith.constant dense<0xFF800000> : vector<16xf32>
    %82 = vector.multi_reduction <maximumf>, %81, %cst_29 [1] : vector<16x16xf32> to vector<16xf32>
    %83 = vector.shape_cast %82 : vector<16xf32> to vector<16x1xf32>
    %84 = vector.broadcast %83 : vector<16x1xf32> to vector<16x16xf32>
    %85 = arith.subf %81, %84 : vector<16x16xf32>
    %86 = math.exp %85 : vector<16x16xf32>
    %cst_30 = arith.constant dense<0.000000e+00> : vector<16xf32>
    %87 = vector.multi_reduction <add>, %86, %cst_30 [1] : vector<16x16xf32> to vector<16xf32>
    %88 = vector.shape_cast %87 : vector<16xf32> to vector<16x1xf32>
    %89 = tpu.reciprocal %88 {approx = true} : vector<16x1xf32> -> vector<16x1xf32>
    %90 = vector.broadcast %89 : vector<16x1xf32> to vector<16x16xf32>
    %91 = arith.mulf %86, %90 : vector<16x16xf32>
    %92 = arith.truncf %91 : vector<16x16xf32> to vector<16x16xbf16>
    %93 = vector.extract_strided_slice %75 {offsets = [0, 0], sizes = [16, 16], strides = [1, 1]} : vector<16x32xbf16> to vector<16x16xbf16>
    %cst_31 = arith.constant dense<0.000000e+00> : vector<16x16xf32>
    %94 = tpu.matmul %92, %93, %cst_31 {dimension_numbers = #tpu.dot_dimension_numbers<[1], [0], [0], [1], [0, 0, 1, 1], [], []>} : vector<16x16xbf16>, vector<16x16xbf16>, vector<16x16xf32> -> vector<16x16xf32>
    %95 = arith.truncf %94 : vector<16x16xf32> to vector<16x16xbf16>
    %96 = vector.extract_strided_slice %77 {offsets = [0, 0], sizes = [16, 32], strides = [1, 1]} : vector<32x32xbf16> to vector<16x32xbf16>
    %cst_32 = arith.constant dense<0.000000e+00> : vector<16x32xf32>
    %97 = tpu.matmul %95, %96, %cst_32 {dimension_numbers = #tpu.dot_dimension_numbers<[1], [0], [0], [1], [0, 0, 1, 1], [], []>} : vector<16x16xbf16>, vector<16x32xbf16>, vector<16x32xf32> -> vector<16x32xf32>
    %98 = vector.extract_strided_slice %66 {offsets = [0, 16], sizes = [16, 16], strides = [1, 1]} : vector<16x32xbf16> to vector<16x16xbf16>
    %99 = vector.extract_strided_slice %74 {offsets = [16, 0], sizes = [16, 16], strides = [1, 1]} : vector<32x16xbf16> to vector<16x16xbf16>
    %cst_33 = arith.constant dense<0.000000e+00> : vector<16x16xf32>
    %100 = tpu.matmul %98, %99, %cst_33 {dimension_numbers = #tpu.dot_dimension_numbers<[1], [0], [0], [1], [0, 0, 1, 1], [], []>} : vector<16x16xbf16>, vector<16x16xbf16>, vector<16x16xf32> -> vector<16x16xf32>
    %101 = arith.addf %100, %4 : vector<16x16xf32>
    %cst_34 = arith.constant dense<0xFF800000> : vector<16xf32>
    %102 = vector.multi_reduction <maximumf>, %101, %cst_34 [1] : vector<16x16xf32> to vector<16xf32>
    %103 = vector.shape_cast %102 : vector<16xf32> to vector<16x1xf32>
    %104 = vector.broadcast %103 : vector<16x1xf32> to vector<16x16xf32>
    %105 = arith.subf %101, %104 : vector<16x16xf32>
    %106 = math.exp %105 : vector<16x16xf32>
    %cst_35 = arith.constant dense<0.000000e+00> : vector<16xf32>
    %107 = vector.multi_reduction <add>, %106, %cst_35 [1] : vector<16x16xf32> to vector<16xf32>
    %108 = vector.shape_cast %107 : vector<16xf32> to vector<16x1xf32>
    %109 = tpu.reciprocal %108 {approx = true} : vector<16x1xf32> -> vector<16x1xf32>
    %110 = vector.broadcast %109 : vector<16x1xf32> to vector<16x16xf32>
    %111 = arith.mulf %106, %110 : vector<16x16xf32>
    %112 = arith.truncf %111 : vector<16x16xf32> to vector<16x16xbf16>
    %113 = vector.extract_strided_slice %75 {offsets = [0, 16], sizes = [16, 16], strides = [1, 1]} : vector<16x32xbf16> to vector<16x16xbf16>
    %cst_36 = arith.constant dense<0.000000e+00> : vector<16x16xf32>
    %114 = tpu.matmul %112, %113, %cst_36 {dimension_numbers = #tpu.dot_dimension_numbers<[1], [0], [0], [1], [0, 0, 1, 1], [], []>} : vector<16x16xbf16>, vector<16x16xbf16>, vector<16x16xf32> -> vector<16x16xf32>
    %115 = arith.truncf %114 : vector<16x16xf32> to vector<16x16xbf16>
    %116 = vector.extract_strided_slice %77 {offsets = [16, 0], sizes = [16, 32], strides = [1, 1]} : vector<32x32xbf16> to vector<16x32xbf16>
    %cst_37 = arith.constant dense<0.000000e+00> : vector<16x32xf32>
    %117 = tpu.matmul %115, %116, %cst_37 {dimension_numbers = #tpu.dot_dimension_numbers<[1], [0], [0], [1], [0, 0, 1, 1], [], []>} : vector<16x16xbf16>, vector<16x32xbf16>, vector<16x32xf32> -> vector<16x32xf32>
    %118 = arith.addf %97, %117 : vector<16x32xf32>
    %119 = vector.broadcast %12 : vector<1x32xf32> to vector<16x32xf32>
    %120 = arith.addf %118, %119 : vector<16x32xf32>
    %121 = arith.addf %120, %0 : vector<16x32xf32>
    %cst_38 = arith.constant dense<0.000000e+00> : vector<16xf32>
    %122 = vector.multi_reduction <add>, %121, %cst_38 [1] : vector<16x32xf32> to vector<16xf32>
    %123 = vector.shape_cast %122 : vector<16xf32> to vector<16x1xf32>
    %cst_39 = arith.constant 3.200000e+01 : f32
    %124 = vector.broadcast %cst_39 : f32 to vector<16x1xf32>
    %125 = arith.divf %123, %124 : vector<16x1xf32>
    %126 = vector.broadcast %125 : vector<16x1xf32> to vector<16x32xf32>
    %127 = arith.subf %121, %126 : vector<16x32xf32>
    %128 = arith.mulf %127, %127 : vector<16x32xf32>
    %cst_40 = arith.constant dense<0.000000e+00> : vector<16xf32>
    %129 = vector.multi_reduction <add>, %128, %cst_40 [1] : vector<16x32xf32> to vector<16xf32>
    %130 = vector.shape_cast %129 : vector<16xf32> to vector<16x1xf32>
    %cst_41 = arith.constant 3.200000e+01 : f32
    %131 = vector.broadcast %cst_41 : f32 to vector<16x1xf32>
    %132 = arith.divf %130, %131 : vector<16x1xf32>
    %133 = vector.broadcast %125 : vector<16x1xf32> to vector<16x32xf32>
    %134 = arith.subf %121, %133 : vector<16x32xf32>
    %cst_42 = arith.constant 9.99999974E-6 : f32
    %135 = vector.broadcast %cst_42 : f32 to vector<16x1xf32>
    %136 = arith.addf %132, %135 : vector<16x1xf32>
    %137 = math.rsqrt %136 : vector<16x1xf32>
    %138 = vector.broadcast %137 : vector<16x1xf32> to vector<16x32xf32>
    %139 = arith.mulf %134, %138 : vector<16x32xf32>
    %140 = vector.broadcast %13 : vector<1x32xf32> to vector<16x32xf32>
    %141 = arith.mulf %139, %140 : vector<16x32xf32>
    %142 = vector.broadcast %14 : vector<1x32xf32> to vector<16x32xf32>
    %143 = arith.addf %141, %142 : vector<16x32xf32>
    %144 = arith.truncf %143 : vector<16x32xf32> to vector<16x32xbf16>
    %c0_43 = arith.constant 0 : index
    %c0_44 = arith.constant 0 : index
    %c0_45 = arith.constant 0 : index
    %145 = vector.load %arg7[%c0_43, %c0_44, %c0_45] : memref<2x32x64xbf16, #tpu.memory_space<vmem>>, vector<1x32x64xbf16>
    %146 = vector.shape_cast %145 : vector<1x32x64xbf16> to vector<32x64xbf16>
    %cst_46 = arith.constant dense<0.000000e+00> : vector<16x64xf32>
    %147 = tpu.matmul %144, %146, %cst_46 {dimension_numbers = #tpu.dot_dimension_numbers<[1], [0], [0], [1], [0, 0, 1, 1], [], []>} : vector<16x32xbf16>, vector<32x64xbf16>, vector<16x64xf32> -> vector<16x64xf32>
    %148 = vector.broadcast %17 : vector<1x64xf32> to vector<16x64xf32>
    %149 = arith.addf %147, %148 : vector<16x64xf32>
    %150 = arith.mulf %149, %149 : vector<16x64xf32>
    %151 = arith.mulf %149, %150 : vector<16x64xf32>
    %cst_47 = arith.constant 4.471500e-02 : f32
    %152 = vector.broadcast %cst_47 : f32 to vector<16x64xf32>
    %153 = arith.mulf %152, %151 : vector<16x64xf32>
    %154 = arith.addf %149, %153 : vector<16x64xf32>
    %cst_48 = arith.constant 0.797884583 : f32
    %155 = vector.broadcast %cst_48 : f32 to vector<16x64xf32>
    %156 = arith.mulf %155, %154 : vector<16x64xf32>
    %157 = math.tanh %156 : vector<16x64xf32>
    %cst_49 = arith.constant 1.000000e+00 : f32
    %158 = vector.broadcast %cst_49 : f32 to vector<16x64xf32>
    %159 = arith.addf %158, %157 : vector<16x64xf32>
    %cst_50 = arith.constant 5.000000e-01 : f32
    %160 = vector.broadcast %cst_50 : f32 to vector<16x64xf32>
    %161 = arith.mulf %160, %159 : vector<16x64xf32>
    %162 = arith.mulf %149, %161 : vector<16x64xf32>
    %163 = arith.truncf %162 : vector<16x64xf32> to vector<16x64xbf16>
    %c0_51 = arith.constant 0 : index
    %c0_52 = arith.constant 0 : index
    %c0_53 = arith.constant 0 : index
    %164 = vector.load %arg8[%c0_51, %c0_52, %c0_53] : memref<2x64x32xbf16, #tpu.memory_space<vmem>>, vector<1x64x32xbf16>
    %165 = vector.shape_cast %164 : vector<1x64x32xbf16> to vector<64x32xbf16>
    %cst_54 = arith.constant dense<0.000000e+00> : vector<16x32xf32>
    %166 = tpu.matmul %163, %165, %cst_54 {dimension_numbers = #tpu.dot_dimension_numbers<[1], [0], [0], [1], [0, 0, 1, 1], [], []>} : vector<16x64xbf16>, vector<64x32xbf16>, vector<16x32xf32> -> vector<16x32xf32>
    %167 = vector.broadcast %15 : vector<1x32xf32> to vector<16x32xf32>
    %168 = arith.addf %166, %167 : vector<16x32xf32>
    %169 = arith.addf %168, %121 : vector<16x32xf32>
    %c1 = arith.constant 1 : index
    %c0_55 = arith.constant 0 : index
    %c0_56 = arith.constant 0 : index
    %170 = vector.load %arg9[%c1, %c0_55, %c0_56] : memref<2x9x32xf32, #tpu.memory_space<vmem>>, vector<1x9x32xf32>
    %171 = vector.shape_cast %170 : vector<1x9x32xf32> to vector<9x32xf32>
    %172 = vector.extract_strided_slice %171 {offsets = [0, 0], sizes = [1, 32], strides = [1, 1]} : vector<9x32xf32> to vector<1x32xf32>
    %173 = vector.extract_strided_slice %171 {offsets = [1, 0], sizes = [1, 32], strides = [1, 1]} : vector<9x32xf32> to vector<1x32xf32>
    %174 = vector.extract_strided_slice %171 {offsets = [2, 0], sizes = [1, 32], strides = [1, 1]} : vector<9x32xf32> to vector<1x32xf32>
    %175 = vector.extract_strided_slice %171 {offsets = [3, 0], sizes = [1, 32], strides = [1, 1]} : vector<9x32xf32> to vector<1x32xf32>
    %176 = vector.extract_strided_slice %171 {offsets = [4, 0], sizes = [1, 32], strides = [1, 1]} : vector<9x32xf32> to vector<1x32xf32>
    %177 = vector.extract_strided_slice %171 {offsets = [5, 0], sizes = [1, 32], strides = [1, 1]} : vector<9x32xf32> to vector<1x32xf32>
    %178 = vector.extract_strided_slice %171 {offsets = [6, 0], sizes = [1, 32], strides = [1, 1]} : vector<9x32xf32> to vector<1x32xf32>
    %179 = vector.extract_strided_slice %171 {offsets = [7, 0], sizes = [1, 32], strides = [1, 1]} : vector<9x32xf32> to vector<1x32xf32>
    %180 = vector.extract_strided_slice %171 {offsets = [8, 0], sizes = [1, 32], strides = [1, 1]} : vector<9x32xf32> to vector<1x32xf32>
    %c1_57 = arith.constant 1 : index
    %c0_58 = arith.constant 0 : index
    %c0_59 = arith.constant 0 : index
    %181 = vector.load %arg10[%c1_57, %c0_58, %c0_59] : memref<2x1x64xf32, #tpu.memory_space<vmem>>, vector<1x1x64xf32>
    %182 = vector.shape_cast %181 : vector<1x1x64xf32> to vector<1x64xf32>
    %c1_60 = arith.constant 1 : index
    %c0_61 = arith.constant 0 : index
    %c0_62 = arith.constant 0 : index
    %c0_63 = arith.constant 0 : index
    %183 = vector.load %arg6[%c1_60, %c0_61, %c0_62, %c0_63] : memref<2x4x32x32xbf16, #tpu.memory_space<vmem>>, vector<1x4x32x32xbf16>
    %184 = vector.shape_cast %183 : vector<1x4x32x32xbf16> to vector<4x32x32xbf16>
    %cst_64 = arith.constant dense<0.000000e+00> : vector<16xf32>
    %185 = vector.multi_reduction <add>, %169, %cst_64 [1] : vector<16x32xf32> to vector<16xf32>
    %186 = vector.shape_cast %185 : vector<16xf32> to vector<16x1xf32>
    %cst_65 = arith.constant 3.200000e+01 : f32
    %187 = vector.broadcast %cst_65 : f32 to vector<16x1xf32>
    %188 = arith.divf %186, %187 : vector<16x1xf32>
    %189 = vector.broadcast %188 : vector<16x1xf32> to vector<16x32xf32>
    %190 = arith.subf %169, %189 : vector<16x32xf32>
    %191 = arith.mulf %190, %190 : vector<16x32xf32>
    %cst_66 = arith.constant dense<0.000000e+00> : vector<16xf32>
    %192 = vector.multi_reduction <add>, %191, %cst_66 [1] : vector<16x32xf32> to vector<16xf32>
    %193 = vector.shape_cast %192 : vector<16xf32> to vector<16x1xf32>
    %cst_67 = arith.constant 3.200000e+01 : f32
    %194 = vector.broadcast %cst_67 : f32 to vector<16x1xf32>
    %195 = arith.divf %193, %194 : vector<16x1xf32>
    %196 = vector.broadcast %188 : vector<16x1xf32> to vector<16x32xf32>
    %197 = arith.subf %169, %196 : vector<16x32xf32>
    %cst_68 = arith.constant 9.99999974E-6 : f32
    %198 = vector.broadcast %cst_68 : f32 to vector<16x1xf32>
    %199 = arith.addf %195, %198 : vector<16x1xf32>
    %200 = math.rsqrt %199 : vector<16x1xf32>
    %201 = vector.broadcast %200 : vector<16x1xf32> to vector<16x32xf32>
    %202 = arith.mulf %197, %201 : vector<16x32xf32>
    %203 = vector.broadcast %172 : vector<1x32xf32> to vector<16x32xf32>
    %204 = arith.mulf %202, %203 : vector<16x32xf32>
    %205 = vector.broadcast %173 : vector<1x32xf32> to vector<16x32xf32>
    %206 = arith.addf %204, %205 : vector<16x32xf32>
    %207 = arith.truncf %206 : vector<16x32xf32> to vector<16x32xbf16>
    %208 = vector.extract_strided_slice %184 {offsets = [0, 0, 0], sizes = [1, 32, 32], strides = [1, 1, 1]} : vector<4x32x32xbf16> to vector<1x32x32xbf16>
    %209 = vector.shape_cast %208 : vector<1x32x32xbf16> to vector<32x32xbf16>
    %cst_69 = arith.constant dense<0.000000e+00> : vector<16x32xf32>
    %210 = tpu.matmul %207, %209, %cst_69 {dimension_numbers = #tpu.dot_dimension_numbers<[1], [0], [0], [1], [0, 0, 1, 1], [], []>} : vector<16x32xbf16>, vector<32x32xbf16>, vector<16x32xf32> -> vector<16x32xf32>
    %211 = vector.broadcast %174 : vector<1x32xf32> to vector<16x32xf32>
    %212 = arith.addf %210, %211 : vector<16x32xf32>
    %213 = vector.extract_strided_slice %184 {offsets = [1, 0, 0], sizes = [1, 32, 32], strides = [1, 1, 1]} : vector<4x32x32xbf16> to vector<1x32x32xbf16>
    %214 = vector.shape_cast %213 : vector<1x32x32xbf16> to vector<32x32xbf16>
    %cst_70 = arith.constant dense<0.000000e+00> : vector<16x32xf32>
    %215 = tpu.matmul %207, %214, %cst_70 {dimension_numbers = #tpu.dot_dimension_numbers<[1], [0], [0], [1], [0, 0, 1, 1], [], []>} : vector<16x32xbf16>, vector<32x32xbf16>, vector<16x32xf32> -> vector<16x32xf32>
    %216 = vector.broadcast %175 : vector<1x32xf32> to vector<16x32xf32>
    %217 = arith.addf %215, %216 : vector<16x32xf32>
    %218 = vector.extract_strided_slice %184 {offsets = [2, 0, 0], sizes = [1, 32, 32], strides = [1, 1, 1]} : vector<4x32x32xbf16> to vector<1x32x32xbf16>
    %219 = vector.shape_cast %218 : vector<1x32x32xbf16> to vector<32x32xbf16>
    %cst_71 = arith.constant dense<0.000000e+00> : vector<16x32xf32>
    %220 = tpu.matmul %207, %219, %cst_71 {dimension_numbers = #tpu.dot_dimension_numbers<[1], [0], [0], [1], [0, 0, 1, 1], [], []>} : vector<16x32xbf16>, vector<32x32xbf16>, vector<16x32xf32> -> vector<16x32xf32>
    %221 = vector.broadcast %176 : vector<1x32xf32> to vector<16x32xf32>
    %222 = arith.addf %220, %221 : vector<16x32xf32>
    %223 = arith.truncf %212 : vector<16x32xf32> to vector<16x32xbf16>
    %224 = arith.truncf %217 : vector<16x32xf32> to vector<16x32xbf16>
    %225 = arith.mulf %223, %1 : vector<16x32xbf16>
    %cst_72 = arith.constant dense<0.000000e+00> : vector<16x32xf32>
    %226 = tpu.matmul %223, %3, %cst_72 {dimension_numbers = #tpu.dot_dimension_numbers<[1], [0], [0], [1], [0, 0, 1, 1], [], []>} : vector<16x32xbf16>, vector<32x32xbf16>, vector<16x32xf32> -> vector<16x32xf32>
    %227 = arith.extf %2 : vector<16x32xbf16> to vector<16x32xf32>
    %228 = arith.mulf %226, %227 : vector<16x32xf32>
    %229 = arith.extf %225 : vector<16x32xbf16> to vector<16x32xf32>
    %230 = arith.addf %229, %228 : vector<16x32xf32>
    %231 = arith.truncf %230 : vector<16x32xf32> to vector<16x32xbf16>
    %232 = arith.mulf %224, %1 : vector<16x32xbf16>
    %cst_73 = arith.constant dense<0.000000e+00> : vector<16x32xf32>
    %233 = tpu.matmul %224, %3, %cst_73 {dimension_numbers = #tpu.dot_dimension_numbers<[1], [0], [0], [1], [0, 0, 1, 1], [], []>} : vector<16x32xbf16>, vector<32x32xbf16>, vector<16x32xf32> -> vector<16x32xf32>
    %234 = arith.extf %2 : vector<16x32xbf16> to vector<16x32xf32>
    %235 = arith.mulf %233, %234 : vector<16x32xf32>
    %236 = arith.extf %232 : vector<16x32xbf16> to vector<16x32xf32>
    %237 = arith.addf %236, %235 : vector<16x32xf32>
    %238 = arith.truncf %237 : vector<16x32xf32> to vector<16x32xbf16>
    %239 = tpu.transpose %238, [1, 0] : vector<16x32xbf16> -> vector<32x16xbf16>
    %240 = arith.truncf %222 : vector<16x32xf32> to vector<16x32xbf16>
    %241 = vector.extract_strided_slice %184 {offsets = [3, 0, 0], sizes = [1, 32, 32], strides = [1, 1, 1]} : vector<4x32x32xbf16> to vector<1x32x32xbf16>
    %242 = vector.shape_cast %241 : vector<1x32x32xbf16> to vector<32x32xbf16>
    %243 = vector.extract_strided_slice %231 {offsets = [0, 0], sizes = [16, 16], strides = [1, 1]} : vector<16x32xbf16> to vector<16x16xbf16>
    %244 = vector.extract_strided_slice %239 {offsets = [0, 0], sizes = [16, 16], strides = [1, 1]} : vector<32x16xbf16> to vector<16x16xbf16>
    %cst_74 = arith.constant dense<0.000000e+00> : vector<16x16xf32>
    %245 = tpu.matmul %243, %244, %cst_74 {dimension_numbers = #tpu.dot_dimension_numbers<[1], [0], [0], [1], [0, 0, 1, 1], [], []>} : vector<16x16xbf16>, vector<16x16xbf16>, vector<16x16xf32> -> vector<16x16xf32>
    %246 = arith.addf %245, %4 : vector<16x16xf32>
    %cst_75 = arith.constant dense<0xFF800000> : vector<16xf32>
    %247 = vector.multi_reduction <maximumf>, %246, %cst_75 [1] : vector<16x16xf32> to vector<16xf32>
    %248 = vector.shape_cast %247 : vector<16xf32> to vector<16x1xf32>
    %249 = vector.broadcast %248 : vector<16x1xf32> to vector<16x16xf32>
    %250 = arith.subf %246, %249 : vector<16x16xf32>
    %251 = math.exp %250 : vector<16x16xf32>
    %cst_76 = arith.constant dense<0.000000e+00> : vector<16xf32>
    %252 = vector.multi_reduction <add>, %251, %cst_76 [1] : vector<16x16xf32> to vector<16xf32>
    %253 = vector.shape_cast %252 : vector<16xf32> to vector<16x1xf32>
    %254 = tpu.reciprocal %253 {approx = true} : vector<16x1xf32> -> vector<16x1xf32>
    %255 = vector.broadcast %254 : vector<16x1xf32> to vector<16x16xf32>
    %256 = arith.mulf %251, %255 : vector<16x16xf32>
    %257 = arith.truncf %256 : vector<16x16xf32> to vector<16x16xbf16>
    %258 = vector.extract_strided_slice %240 {offsets = [0, 0], sizes = [16, 16], strides = [1, 1]} : vector<16x32xbf16> to vector<16x16xbf16>
    %cst_77 = arith.constant dense<0.000000e+00> : vector<16x16xf32>
    %259 = tpu.matmul %257, %258, %cst_77 {dimension_numbers = #tpu.dot_dimension_numbers<[1], [0], [0], [1], [0, 0, 1, 1], [], []>} : vector<16x16xbf16>, vector<16x16xbf16>, vector<16x16xf32> -> vector<16x16xf32>
    %260 = arith.truncf %259 : vector<16x16xf32> to vector<16x16xbf16>
    %261 = vector.extract_strided_slice %242 {offsets = [0, 0], sizes = [16, 32], strides = [1, 1]} : vector<32x32xbf16> to vector<16x32xbf16>
    %cst_78 = arith.constant dense<0.000000e+00> : vector<16x32xf32>
    %262 = tpu.matmul %260, %261, %cst_78 {dimension_numbers = #tpu.dot_dimension_numbers<[1], [0], [0], [1], [0, 0, 1, 1], [], []>} : vector<16x16xbf16>, vector<16x32xbf16>, vector<16x32xf32> -> vector<16x32xf32>
    %263 = vector.extract_strided_slice %231 {offsets = [0, 16], sizes = [16, 16], strides = [1, 1]} : vector<16x32xbf16> to vector<16x16xbf16>
    %264 = vector.extract_strided_slice %239 {offsets = [16, 0], sizes = [16, 16], strides = [1, 1]} : vector<32x16xbf16> to vector<16x16xbf16>
    %cst_79 = arith.constant dense<0.000000e+00> : vector<16x16xf32>
    %265 = tpu.matmul %263, %264, %cst_79 {dimension_numbers = #tpu.dot_dimension_numbers<[1], [0], [0], [1], [0, 0, 1, 1], [], []>} : vector<16x16xbf16>, vector<16x16xbf16>, vector<16x16xf32> -> vector<16x16xf32>
    %266 = arith.addf %265, %4 : vector<16x16xf32>
    %cst_80 = arith.constant dense<0xFF800000> : vector<16xf32>
    %267 = vector.multi_reduction <maximumf>, %266, %cst_80 [1] : vector<16x16xf32> to vector<16xf32>
    %268 = vector.shape_cast %267 : vector<16xf32> to vector<16x1xf32>
    %269 = vector.broadcast %268 : vector<16x1xf32> to vector<16x16xf32>
    %270 = arith.subf %266, %269 : vector<16x16xf32>
    %271 = math.exp %270 : vector<16x16xf32>
    %cst_81 = arith.constant dense<0.000000e+00> : vector<16xf32>
    %272 = vector.multi_reduction <add>, %271, %cst_81 [1] : vector<16x16xf32> to vector<16xf32>
    %273 = vector.shape_cast %272 : vector<16xf32> to vector<16x1xf32>
    %274 = tpu.reciprocal %273 {approx = true} : vector<16x1xf32> -> vector<16x1xf32>
    %275 = vector.broadcast %274 : vector<16x1xf32> to vector<16x16xf32>
    %276 = arith.mulf %271, %275 : vector<16x16xf32>
    %277 = arith.truncf %276 : vector<16x16xf32> to vector<16x16xbf16>
    %278 = vector.extract_strided_slice %240 {offsets = [0, 16], sizes = [16, 16], strides = [1, 1]} : vector<16x32xbf16> to vector<16x16xbf16>
    %cst_82 = arith.constant dense<0.000000e+00> : vector<16x16xf32>
    %279 = tpu.matmul %277, %278, %cst_82 {dimension_numbers = #tpu.dot_dimension_numbers<[1], [0], [0], [1], [0, 0, 1, 1], [], []>} : vector<16x16xbf16>, vector<16x16xbf16>, vector<16x16xf32> -> vector<16x16xf32>
    %280 = arith.truncf %279 : vector<16x16xf32> to vector<16x16xbf16>
    %281 = vector.extract_strided_slice %242 {offsets = [16, 0], sizes = [16, 32], strides = [1, 1]} : vector<32x32xbf16> to vector<16x32xbf16>
    %cst_83 = arith.constant dense<0.000000e+00> : vector<16x32xf32>
    %282 = tpu.matmul %280, %281, %cst_83 {dimension_numbers = #tpu.dot_dimension_numbers<[1], [0], [0], [1], [0, 0, 1, 1], [], []>} : vector<16x16xbf16>, vector<16x32xbf16>, vector<16x32xf32> -> vector<16x32xf32>
    %283 = arith.addf %262, %282 : vector<16x32xf32>
    %284 = vector.broadcast %177 : vector<1x32xf32> to vector<16x32xf32>
    %285 = arith.addf %283, %284 : vector<16x32xf32>
    %286 = arith.addf %285, %169 : vector<16x32xf32>
    %cst_84 = arith.constant dense<0.000000e+00> : vector<16xf32>
    %287 = vector.multi_reduction <add>, %286, %cst_84 [1] : vector<16x32xf32> to vector<16xf32>
    %288 = vector.shape_cast %287 : vector<16xf32> to vector<16x1xf32>
    %cst_85 = arith.constant 3.200000e+01 : f32
    %289 = vector.broadcast %cst_85 : f32 to vector<16x1xf32>
    %290 = arith.divf %288, %289 : vector<16x1xf32>
    %291 = vector.broadcast %290 : vector<16x1xf32> to vector<16x32xf32>
    %292 = arith.subf %286, %291 : vector<16x32xf32>
    %293 = arith.mulf %292, %292 : vector<16x32xf32>
    %cst_86 = arith.constant dense<0.000000e+00> : vector<16xf32>
    %294 = vector.multi_reduction <add>, %293, %cst_86 [1] : vector<16x32xf32> to vector<16xf32>
    %295 = vector.shape_cast %294 : vector<16xf32> to vector<16x1xf32>
    %cst_87 = arith.constant 3.200000e+01 : f32
    %296 = vector.broadcast %cst_87 : f32 to vector<16x1xf32>
    %297 = arith.divf %295, %296 : vector<16x1xf32>
    %298 = vector.broadcast %290 : vector<16x1xf32> to vector<16x32xf32>
    %299 = arith.subf %286, %298 : vector<16x32xf32>
    %cst_88 = arith.constant 9.99999974E-6 : f32
    %300 = vector.broadcast %cst_88 : f32 to vector<16x1xf32>
    %301 = arith.addf %297, %300 : vector<16x1xf32>
    %302 = math.rsqrt %301 : vector<16x1xf32>
    %303 = vector.broadcast %302 : vector<16x1xf32> to vector<16x32xf32>
    %304 = arith.mulf %299, %303 : vector<16x32xf32>
    %305 = vector.broadcast %178 : vector<1x32xf32> to vector<16x32xf32>
    %306 = arith.mulf %304, %305 : vector<16x32xf32>
    %307 = vector.broadcast %179 : vector<1x32xf32> to vector<16x32xf32>
    %308 = arith.addf %306, %307 : vector<16x32xf32>
    %309 = arith.truncf %308 : vector<16x32xf32> to vector<16x32xbf16>
    %c1_89 = arith.constant 1 : index
    %c0_90 = arith.constant 0 : index
    %c0_91 = arith.constant 0 : index
    %310 = vector.load %arg7[%c1_89, %c0_90, %c0_91] : memref<2x32x64xbf16, #tpu.memory_space<vmem>>, vector<1x32x64xbf16>
    %311 = vector.shape_cast %310 : vector<1x32x64xbf16> to vector<32x64xbf16>
    %cst_92 = arith.constant dense<0.000000e+00> : vector<16x64xf32>
    %312 = tpu.matmul %309, %311, %cst_92 {dimension_numbers = #tpu.dot_dimension_numbers<[1], [0], [0], [1], [0, 0, 1, 1], [], []>} : vector<16x32xbf16>, vector<32x64xbf16>, vector<16x64xf32> -> vector<16x64xf32>
    %313 = vector.broadcast %182 : vector<1x64xf32> to vector<16x64xf32>
    %314 = arith.addf %312, %313 : vector<16x64xf32>
    %315 = arith.mulf %314, %314 : vector<16x64xf32>
    %316 = arith.mulf %314, %315 : vector<16x64xf32>
    %cst_93 = arith.constant 4.471500e-02 : f32
    %317 = vector.broadcast %cst_93 : f32 to vector<16x64xf32>
    %318 = arith.mulf %317, %316 : vector<16x64xf32>
    %319 = arith.addf %314, %318 : vector<16x64xf32>
    %cst_94 = arith.constant 0.797884583 : f32
    %320 = vector.broadcast %cst_94 : f32 to vector<16x64xf32>
    %321 = arith.mulf %320, %319 : vector<16x64xf32>
    %322 = math.tanh %321 : vector<16x64xf32>
    %cst_95 = arith.constant 1.000000e+00 : f32
    %323 = vector.broadcast %cst_95 : f32 to vector<16x64xf32>
    %324 = arith.addf %323, %322 : vector<16x64xf32>
    %cst_96 = arith.constant 5.000000e-01 : f32
    %325 = vector.broadcast %cst_96 : f32 to vector<16x64xf32>
    %326 = arith.mulf %325, %324 : vector<16x64xf32>
    %327 = arith.mulf %314, %326 : vector<16x64xf32>
    %328 = arith.truncf %327 : vector<16x64xf32> to vector<16x64xbf16>
    %c1_97 = arith.constant 1 : index
    %c0_98 = arith.constant 0 : index
    %c0_99 = arith.constant 0 : index
    %329 = vector.load %arg8[%c1_97, %c0_98, %c0_99] : memref<2x64x32xbf16, #tpu.memory_space<vmem>>, vector<1x64x32xbf16>
    %330 = vector.shape_cast %329 : vector<1x64x32xbf16> to vector<64x32xbf16>
    %cst_100 = arith.constant dense<0.000000e+00> : vector<16x32xf32>
    %331 = tpu.matmul %328, %330, %cst_100 {dimension_numbers = #tpu.dot_dimension_numbers<[1], [0], [0], [1], [0, 0, 1, 1], [], []>} : vector<16x64xbf16>, vector<64x32xbf16>, vector<16x32xf32> -> vector<16x32xf32>
    %332 = vector.broadcast %180 : vector<1x32xf32> to vector<16x32xf32>
    %333 = arith.addf %331, %332 : vector<16x32xf32>
    %334 = arith.addf %333, %286 : vector<16x32xf32>
    %c0_101 = arith.constant 0 : index
    %c0_102 = arith.constant 0 : index
    %335 = vector.load %arg11[%c0_101, %c0_102] : memref<2x32xf32, #tpu.memory_space<vmem>>, vector<2x32xf32>
    %336 = vector.extract_strided_slice %335 {offsets = [0, 0], sizes = [1, 32], strides = [1, 1]} : vector<2x32xf32> to vector<1x32xf32>
    %337 = vector.extract_strided_slice %335 {offsets = [1, 0], sizes = [1, 32], strides = [1, 1]} : vector<2x32xf32> to vector<1x32xf32>
    %cst_103 = arith.constant dense<0.000000e+00> : vector<16xf32>
    %338 = vector.multi_reduction <add>, %334, %cst_103 [1] : vector<16x32xf32> to vector<16xf32>
    %339 = vector.shape_cast %338 : vector<16xf32> to vector<16x1xf32>
    %cst_104 = arith.constant 3.200000e+01 : f32
    %340 = vector.broadcast %cst_104 : f32 to vector<16x1xf32>
    %341 = arith.divf %339, %340 : vector<16x1xf32>
    %342 = vector.broadcast %341 : vector<16x1xf32> to vector<16x32xf32>
    %343 = arith.subf %334, %342 : vector<16x32xf32>
    %344 = arith.mulf %343, %343 : vector<16x32xf32>
    %cst_105 = arith.constant dense<0.000000e+00> : vector<16xf32>
    %345 = vector.multi_reduction <add>, %344, %cst_105 [1] : vector<16x32xf32> to vector<16xf32>
    %346 = vector.shape_cast %345 : vector<16xf32> to vector<16x1xf32>
    %cst_106 = arith.constant 3.200000e+01 : f32
    %347 = vector.broadcast %cst_106 : f32 to vector<16x1xf32>
    %348 = arith.divf %346, %347 : vector<16x1xf32>
    %349 = vector.broadcast %341 : vector<16x1xf32> to vector<16x32xf32>
    %350 = arith.subf %334, %349 : vector<16x32xf32>
    %cst_107 = arith.constant 9.99999974E-6 : f32
    %351 = vector.broadcast %cst_107 : f32 to vector<16x1xf32>
    %352 = arith.addf %348, %351 : vector<16x1xf32>
    %353 = math.rsqrt %352 : vector<16x1xf32>
    %354 = vector.broadcast %353 : vector<16x1xf32> to vector<16x32xf32>
    %355 = arith.mulf %350, %354 : vector<16x32xf32>
    %356 = vector.broadcast %336 : vector<1x32xf32> to vector<16x32xf32>
    %357 = arith.mulf %355, %356 : vector<16x32xf32>
    %358 = vector.broadcast %337 : vector<1x32xf32> to vector<16x32xf32>
    %359 = arith.addf %357, %358 : vector<16x32xf32>
    %c0_108 = arith.constant 0 : index
    %c0_109 = arith.constant 0 : index
    %360 = vector.load %arg12[%c0_108, %c0_109] : memref<16x32xf32, #tpu.memory_space<vmem>>, vector<16x32xf32>
    tpu.vector_store %arg12[%c0_108, %c0_109], %359 {strides = array<i32>} : memref<16x32xf32, #tpu.memory_space<vmem>>, vector<16x32xf32>,
    return
  }
  func.func @transform_0(%arg0: i32) -> (i32, i32) {
    %c0_i32 = arith.constant 0 : i32
    %c0_i32_0 = arith.constant 0 : i32
    %c0_i32_1 = arith.constant 0 : i32
    return %c0_i32, %c0_i32_0 : i32, i32
  }
  func.func @transform_1(%arg0: i32) -> (i32, i32) {
    %c0_i32 = arith.constant 0 : i32
    %c0_i32_0 = arith.constant 0 : i32
    %c0_i32_1 = arith.constant 0 : i32
    return %c0_i32, %c0_i32_0 : i32, i32
  }
  func.func @transform_2(%arg0: i32) -> (i32, i32) {
    %c0_i32 = arith.constant 0 : i32
    %c0_i32_0 = arith.constant 0 : i32
    %c0_i32_1 = arith.constant 0 : i32
    return %c0_i32, %c0_i32_0 : i32, i32
  }
  func.func @transform_3(%arg0: i32) -> (i32, i32) {
    %c0_i32 = arith.constant 0 : i32
    %c0_i32_0 = arith.constant 0 : i32
    %c0_i32_1 = arith.constant 0 : i32
    return %c0_i32, %c0_i32_0 : i32, i32
  }
  func.func @transform_4(%arg0: i32) -> (i32, i32) {
    %c0_i32 = arith.constant 0 : i32
    %c0_i32_0 = arith.constant 0 : i32
    %c0_i32_1 = arith.constant 0 : i32
    return %c0_i32, %c0_i32_0 : i32, i32
  }
  func.func @transform_5(%arg0: i32) -> (i32, i32, i32, i32) {
    %c0_i32 = arith.constant 0 : i32
    %c0_i32_0 = arith.constant 0 : i32
    %c0_i32_1 = arith.constant 0 : i32
    %c0_i32_2 = arith.constant 0 : i32
    %c0_i32_3 = arith.constant 0 : i32
    return %c0_i32, %c0_i32_0, %c0_i32_1, %c0_i32_2 : i32, i32, i32, i32
  }
  func.func @transform_6(%arg0: i32) -> (i32, i32, i32) {
    %c0_i32 = arith.constant 0 : i32
    %c0_i32_0 = arith.constant 0 : i32
    %c0_i32_1 = arith.constant 0 : i32
    %c0_i32_2 = arith.constant 0 : i32
    return %c0_i32, %c0_i32_0, %c0_i32_1 : i32, i32, i32
  }
  func.func @transform_7(%arg0: i32) -> (i32, i32, i32) {
    %c0_i32 = arith.constant 0 : i32
    %c0_i32_0 = arith.constant 0 : i32
    %c0_i32_1 = arith.constant 0 : i32
    %c0_i32_2 = arith.constant 0 : i32
    return %c0_i32, %c0_i32_0, %c0_i32_1 : i32, i32, i32
  }
  func.func @transform_8(%arg0: i32) -> (i32, i32, i32) {
    %c0_i32 = arith.constant 0 : i32
    %c0_i32_0 = arith.constant 0 : i32
    %c0_i32_1 = arith.constant 0 : i32
    %c0_i32_2 = arith.constant 0 : i32
    return %c0_i32, %c0_i32_0, %c0_i32_1 : i32, i32, i32
  }
  func.func @transform_9(%arg0: i32) -> (i32, i32, i32) {
    %c0_i32 = arith.constant 0 : i32
    %c0_i32_0 = arith.constant 0 : i32
    %c0_i32_1 = arith.constant 0 : i32
    %c0_i32_2 = arith.constant 0 : i32
    return %c0_i32, %c0_i32_0, %c0_i32_1 : i32, i32, i32
  }
  func.func @transform_10(%arg0: i32) -> (i32, i32) {
    %c0_i32 = arith.constant 0 : i32
    %c0_i32_0 = arith.constant 0 : i32
    %c0_i32_1 = arith.constant 0 : i32
    return %c0_i32, %c0_i32_0 : i32, i32
  }
  func.func @transform_11(%arg0: i32) -> (i32, i32) {
    %c0_i32 = arith.constant 0 : i32
    %c0_i32_0 = arith.constant 0 : i32
    %c0_i32_1 = arith.constant 0 : i32
    return %c0_i32, %c0_i32_0 : i32, i32
  }
}

</mosaic_0001>

<llo_original>
// kernel: tpu_custom_call.1
$region0: #{tpu_custom_call.1}
  #allocation0 [shape = 'u32[]', space=smem, size = 0x4, offset = 0x4, fixed_abs, tag = 'smem constant byte address 0x4 - core index']
  #allocation1 [shape = 'u32[72,128]{1,0:T(1,128)}', space=vmem, size = 0x9000, scoped, tag = 'internal scratch']
  %s0 = inlined_call_operand.vmem [shape: f32[16,32], index: 0, kind: input, shape index: {}]
  %s1 = inlined_call_operand.vmem [shape: bf16[16,32], index: 1, kind: input, shape index: {}]
  %s2 = inlined_call_operand.vmem [shape: bf16[16,32], index: 2, kind: input, shape index: {}]
  %s3 = inlined_call_operand.vmem [shape: bf16[32,32], index: 3, kind: input, shape index: {}]
  %s4 = inlined_call_operand.vmem [shape: f32[16,16], index: 4, kind: input, shape index: {}]
  %s5 = inlined_call_operand.hbm [shape: bf16[2,4,32,32], index: 5, kind: input, shape index: {}]
  %s6 = inlined_call_operand.vmem [shape: bf16[2,32,64], index: 6, kind: input, shape index: {}]
  %s7 = inlined_call_operand.vmem [shape: bf16[2,64,32], index: 7, kind: input, shape index: {}]
  %s8 = inlined_call_operand.vmem [shape: f32[2,9,32], index: 8, kind: input, shape index: {}]
  %s9 = inlined_call_operand.vmem [shape: f32[2,1,64], index: 9, kind: input, shape index: {}]
  %s10 = inlined_call_operand.vmem [shape: f32[2,32], index: 10, kind: input, shape index: {}]
  %s11 = inlined_call_operand.hbm [shape: f32[16,32], index: 11, kind: output, shape index: {}]
  %s12 = sld [smem:[#allocation0]]
  $region58: #{tpu_custom_call.1} parent=0
    _
  %s14 = ssub.s32 1, %s12
  %s15 = scalar_select 0, %s14, %s12
  $region1: #{tpu_custom_call.1} parent=0
    #allocation2 [shape = 'u8[65536]{0}', space=vmem, size = 0x10000, scoped, tag = 'input window, operand 5, single buffered']
    #allocation3 [shape = 's32[1]{0}', space=sflag, size = 0x4, scoped, tag = 'scoped memory for tpu_custom_call.1']
    #allocation4 [shape = 's32[1]{0}', space=sflag, size = 0x4, scoped, tag = 'scoped memory for tpu_custom_call.1']
    #allocation5 [shape = 'u8[8192]{0}', space=vmem, size = 0x2000, scoped, tag = 'output window, operand 0, single buffered']
    %16 = vsyncpa [#allocation3], 0
    %17 = vsyncpa [#allocation4], 0
    // Predicated region
    $region2: #{tpu_custom_call.1} parent=1 // pred_check
      _
    $region3: #{tpu_custom_call.1} parent=1 // pred_check_branch
      %19 = sbr.rel (0) target = $region5
    $region4: #{tpu_custom_call.1} parent=1 // pred_region
      _
    $region5: #{tpu_custom_call.1} parent=1 // pred_fallthru
      _
    // Predicated region
    $region6: #{tpu_custom_call.1} parent=1 // pred_check
      _
    $region7: #{tpu_custom_call.1} parent=1 // pred_check_branch
      %21 = sbr.rel (0) target = $region9
    $region8: #{tpu_custom_call.1} parent=1 // pred_region
      _
    $region9: #{tpu_custom_call.1} parent=1 // pred_fallthru
      _
    // Predicated region
    $region10: #{tpu_custom_call.1} parent=1 // pred_check
      _
    $region11: #{tpu_custom_call.1} parent=1 // pred_check_branch
      %23 = sbr.rel (0) target = $region13
    $region12: #{tpu_custom_call.1} parent=1 // pred_region
      _
    $region13: #{tpu_custom_call.1} parent=1 // pred_fallthru
      _
    // Predicated region
    $region14: #{tpu_custom_call.1} parent=1 // pred_check
      _
    $region15: #{tpu_custom_call.1} parent=1 // pred_check_branch
      %25 = sbr.rel (0) target = $region17
    $region16: #{tpu_custom_call.1} parent=1 // pred_region
      _
    $region17: #{tpu_custom_call.1} parent=1 // pred_fallthru
      _
    // Predicated region
    $region18: #{tpu_custom_call.1} parent=1 // pred_check
      _
    $region19: #{tpu_custom_call.1} parent=1 // pred_check_branch
      %27 = sbr.rel (0) target = $region21
    $region20: #{tpu_custom_call.1} parent=1 // pred_region
      _
    $region21: #{tpu_custom_call.1} parent=1 // pred_fallthru
      _
    // Predicated region
    $region22: #{tpu_custom_call.1} parent=1 // pred_check
      _
    $region23: #{tpu_custom_call.1} parent=1 // pred_check_branch
      %29 = sbr.rel (0) target = $region25
    $region24: #{tpu_custom_call.1} parent=1 // pred_region
      %31 = vsyncadd [#allocation3], 0
      %s32 = sshll.u32 %s5, 4
      %s33 = int_to_ptr.hbm [resolvable:$true] %s32
      %s34 = sshll.u32 [#allocation2], 4
      %s35 = int_to_ptr.vmem [resolvable:$true] %s34
      %40 = dma.hbm_to_vmem [thread:$0]  %s33, 2048, %s35, [#allocation3], 64, 64, 4
    $region25: #{tpu_custom_call.1} parent=1 // pred_fallthru
      _
    // Predicated region
    $region26: #{tpu_custom_call.1} parent=1 // pred_check
      _
    $region27: #{tpu_custom_call.1} parent=1 // pred_check_branch
      %42 = sbr.rel (0) target = $region29
    $region28: #{tpu_custom_call.1} parent=1 // pred_region
      _
    $region29: #{tpu_custom_call.1} parent=1 // pred_fallthru
      _
    // Predicated region
    $region30: #{tpu_custom_call.1} parent=1 // pred_check
      _
    $region31: #{tpu_custom_call.1} parent=1 // pred_check_branch
      %44 = sbr.rel (0) target = $region33
    $region32: #{tpu_custom_call.1} parent=1 // pred_region
      _
    $region33: #{tpu_custom_call.1} parent=1 // pred_fallthru
      _
    // Predicated region
    $region34: #{tpu_custom_call.1} parent=1 // pred_check
      _
    $region35: #{tpu_custom_call.1} parent=1 // pred_check_branch
      %46 = sbr.rel (0) target = $region37
    $region36: #{tpu_custom_call.1} parent=1 // pred_region
      _
    $region37: #{tpu_custom_call.1} parent=1 // pred_fallthru
      _
    // Predicated region
    $region38: #{tpu_custom_call.1} parent=1 // pred_check
      _
    $region39: #{tpu_custom_call.1} parent=1 // pred_check_branch
      %48 = sbr.rel (0) target = $region41
    $region40: #{tpu_custom_call.1} parent=1 // pred_region
      _
    $region41: #{tpu_custom_call.1} parent=1 // pred_fallthru
      _
    // Predicated region
    $region42: #{tpu_custom_call.1} parent=1 // pred_check
      _
    $region43: #{tpu_custom_call.1} parent=1 // pred_check_branch
      %50 = sbr.rel (0) target = $region45
    $region44: #{tpu_custom_call.1} parent=1 // pred_region
      _
    $region45: #{tpu_custom_call.1} parent=1 // pred_fallthru
      _
    // Predicated region
    $region46: #{tpu_custom_call.1} parent=1 // pred_check
      _
    $region47: #{tpu_custom_call.1} parent=1 // pred_check_branch
      %52 = sbr.rel (0) target = $region49
    $region48: #{tpu_custom_call.1} parent=1 // pred_region
      %54 = dma.done [#allocation3], 2048
    $region49: #{tpu_custom_call.1} parent=1 // pred_fallthru
      _
    %v56 = vld [vmem:[%s0] sm:$0xff]
    %v57 = vld [vmem:[%s0 + $0x8] sm:$0xff]
    %v58 = vld [vmem:[%s1] sm:$0xf]
    %v59 = vld [vmem:[%s1 + $0x4] sm:$0xf]
    %v60 = vld [vmem:[%s2] sm:$0xf]
    %v61 = vld [vmem:[%s2 + $0x4] sm:$0xf]
    %v62 = vld [vmem:[%s3] sm:$0xf]
    %v63 = vld [vmem:[%s3 + $0x4] sm:$0xf]
    %v64 = vld [vmem:[%s3 + $0x8] sm:$0xf]
    %v65 = vld [vmem:[%s3 + $0xc] sm:$0xf]
    %v66 = vld [vmem:[%s4] sm:$0xff]
    %v67 = vld [vmem:[%s4 + $0x8] sm:$0xff]
    %v68 = vld [vmem:[%s8] sm:$0xff]
    %v69 = vld [vmem:[%s8 + $0x8] sm:$0x1]
    %v70 = vld [vmem:[%s9] sm:$0x1]
    %v71 = vld [vmem:[#allocation2] sm:$0xf]
    %v72 = vld [vmem:[#allocation2 + $0x4] sm:$0xf]
    %v73 = vld [vmem:[#allocation2 + $0x8] sm:$0xf]
    %v74 = vld [vmem:[#allocation2 + $0xc] sm:$0xf]
    %v75 = vld [vmem:[#allocation2 + $0x10] sm:$0xf]
    %v76 = vld [vmem:[#allocation2 + $0x14] sm:$0xf]
    %v77 = vld [vmem:[#allocation2 + $0x18] sm:$0xf]
    %v78 = vld [vmem:[#allocation2 + $0x1c] sm:$0xf]
    %v79 = vld [vmem:[#allocation2 + $0x20] sm:$0xf]
    %v80 = vld [vmem:[#allocation2 + $0x24] sm:$0xf]
    %v81 = vld [vmem:[#allocation2 + $0x28] sm:$0xf]
    %v82 = vld [vmem:[#allocation2 + $0x2c] sm:$0xf]
    %v83 = vld [vmem:[#allocation2 + $0x30] sm:$0xf]
    %v84 = vld [vmem:[#allocation2 + $0x34] sm:$0xf]
    %v85 = vld [vmem:[#allocation2 + $0x38] sm:$0xf]
    %v86 = vld [vmem:[#allocation2 + $0x3c] sm:$0xf]
    %vm87 = vcmask 261120
    %v88 = vsel %vm87, %v56, 0.0
    %89 = vadd.xlane.f32.xlu0 %v88
    %v90 = vpop.xlane.xlu0 %89
    %v91 = vsel %vm87, %v57, 0.0
    %92 = vadd.xlane.f32.xlu0 %v91
    %v93 = vpop.xlane.xlu0 %92
    %v94 = vrcp.pop 32.0
    %v95 = vmul.f32 32.0, %v94
    %v96 = vsub.f32 1.0, %v95
    %v97 = vmul.f32 %v94, %v96
    %v98 = vadd.f32 %v94, %v97
    %vm99 = vweird.f32 %v94
    %v100 = vsel %vm99, %v94, %v98
    %v101 = vmul.f32 %v90, %v100
    %v102 = vmul.f32 %v93, %v100
    %v103 = vsub.f32 %v56, %v101
    %v104 = vsub.f32 %v57, %v102
    %v105 = vmul.f32 %v103, %v103
    %v106 = vmul.f32 %v104, %v104
    %v107 = vsel %vm87, %v105, 0.0
    %108 = vadd.xlane.f32.xlu0 %v107
    %v109 = vpop.xlane.xlu0 %108
    %v110 = vsel %vm87, %v106, 0.0
    %111 = vadd.xlane.f32.xlu0 %v110
    %v112 = vpop.xlane.xlu0 %111
    %v113 = vmul.f32 %v109, %v100
    %v114 = vmul.f32 %v112, %v100
    %v115 = vadd.f32 %v113, 1e-05
    %v116 = vadd.f32 %v114, 1e-05
    %v117 = vrsqrt.pop %v115
    %v118 = vmul.f32 %v117, %v115
    %v119 = vmul.f32 %v118, %v117
    %v120 = vmul.f32 0.5, %v119
    %v121 = vsub.f32 1.5, %v120
    %v122 = vmul.f32 %v117, %v121
    %vm123 = vweird.f32 %v115
    %vm124 = vweird.f32 %v117
    %vm125 = vmor %vm123, %vm124
    %v126 = vsel %vm125, %v117, %v122
    %v127 = vrsqrt.pop %v116
    %v128 = vmul.f32 %v127, %v116
    %v129 = vmul.f32 %v128, %v127
    %v130 = vmul.f32 0.5, %v129
    %v131 = vsub.f32 1.5, %v130
    %v132 = vmul.f32 %v127, %v131
    %vm133 = vweird.f32 %v116
    %vm134 = vweird.f32 %v127
    %vm135 = vmor %vm133, %vm134
    %v136 = vsel %vm135, %v127, %v132
    %v137 = vmul.f32 %v103, %v126
    %v138 = vmul.f32 %v104, %v136
    %v139 = vperm.slane %v68, 0
    %v140 = vmul.f32 %v137, %v139
    %v141 = vmul.f32 %v138, %v139
    %v142 = vperm.slane %v68, 1
    %v143 = vadd.f32 %v140, %v142
    %v144 = vadd.f32 %v141, %v142
    %v145 = vpack.c.bf16 %v144, %v143
    %v146 = vperm.slane %v68, 2
    %v151 = vunpack.c.l.b16 %v71
    %v152 = vunpack.c.l.b16 %v72
    %v153 = vunpack.c.l.b16 %v73
    %v154 = vunpack.c.l.b16 %v74
    %v155 = vpack.c.b16 %v152, %v151
    %v156 = vpack.c.b16 %v154, %v153
    %v160 = vsel %vm87, %v145, 0
    %162 = vmatpush.bf16.msra.mxu0 0
    %163 = vmatpush.bf16.msra.mxu0 0
    %164 = vmatpush.bf16.msra.mxu0 0
    %165 = vmatpush.bf16.msra.mxu0 0
    %166 = vmatpush.bf16.msra.mxu0 0
    %167 = vmatpush.bf16.msra.mxu0 0
    %168 = vmatpush.bf16.msra.mxu0 %v156
    %169 = vmatpush.bf16.msra.mxu0 %v155
    %170 = vmatmul.bf16.gmra.mxu0 %v160
    %v171 = vpop.f32.mrf.mxu0
    %v172 = vadd.f32 %v146, %v171
    %v173 = vpop.f32.mrf.mxu0
    %v174 = vadd.f32 %v146, %v173
    %175 = vdwg.mxu0
    %v176 = vperm.slane %v68, 3
    %v181 = vunpack.c.l.b16 %v75
    %v182 = vunpack.c.l.b16 %v76
    %v183 = vunpack.c.l.b16 %v77
    %v184 = vunpack.c.l.b16 %v78
    %v185 = vpack.c.b16 %v182, %v181
    %v186 = vpack.c.b16 %v184, %v183
    %189 = vmatpush.bf16.msra.mxu0 0
    %190 = vmatpush.bf16.msra.mxu0 0
    %191 = vmatpush.bf16.msra.mxu0 0
    %192 = vmatpush.bf16.msra.mxu0 0
    %193 = vmatpush.bf16.msra.mxu0 0
    %194 = vmatpush.bf16.msra.mxu0 0
    %195 = vmatpush.bf16.msra.mxu0 %v186
    %196 = vmatpush.bf16.msra.mxu0 %v185
    %197 = vmatmul.bf16.gmra.mxu0 %v160
    %v198 = vpop.f32.mrf.mxu0
    %v199 = vadd.f32 %v176, %v198
    %v200 = vpop.f32.mrf.mxu0
    %v201 = vadd.f32 %v176, %v200
    %202 = vdwg.mxu0
    %v203 = vperm.slane %v68, 4
    %v208 = vunpack.c.l.b16 %v79
    %v209 = vunpack.c.l.b16 %v80
    %v210 = vunpack.c.l.b16 %v81
    %v211 = vunpack.c.l.b16 %v82
    %v212 = vpack.c.b16 %v209, %v208
    %v213 = vpack.c.b16 %v211, %v210
    %216 = vmatpush.bf16.msra.mxu0 0
    %217 = vmatpush.bf16.msra.mxu0 0
    %218 = vmatpush.bf16.msra.mxu0 0
    %219 = vmatpush.bf16.msra.mxu0 0
    %220 = vmatpush.bf16.msra.mxu0 0
    %221 = vmatpush.bf16.msra.mxu0 0
    %222 = vmatpush.bf16.msra.mxu0 %v213
    %223 = vmatpush.bf16.msra.mxu0 %v212
    %224 = vmatmul.bf16.gmra.mxu0 %v160
    %v225 = vpop.f32.mrf.mxu0
    %v226 = vadd.f32 %v203, %v225
    %v227 = vpop.f32.mrf.mxu0
    %v228 = vadd.f32 %v203, %v227
    %229 = vdwg.mxu0
    %v230 = vpack.c.bf16 %v172, %v172
    %v231 = vpack.c.bf16 %v174, %v174
    %v232 = vpack.c.bf16 %v199, %v199
    %v233 = vpack.c.bf16 %v201, %v201
    %v234 = vunpack.c.l.bf16 %v230
    %v235 = vunpack.c.l.bf16 %v231
    %v236 = vunpack.c.l.bf16 %v58
    %v237 = vunpack.c.l.bf16 %v59
    %v238 = vmul.f32 %v234, %v236
    %v239 = vmul.f32 %v235, %v237
    %v240 = vpack.c.bf16 %v238, %v238
    %v241 = vpack.c.bf16 %v239, %v239
    %v244 = vunpack.c.l.b16 %v230
    %v245 = vunpack.c.l.b16 %v231
    %v246 = vpack.c.b16 %v245, %v244
    %v251 = vunpack.c.l.b16 %v62
    %v252 = vunpack.c.l.b16 %v63
    %v253 = vunpack.c.l.b16 %v64
    %v254 = vunpack.c.l.b16 %v65
    %v255 = vpack.c.b16 %v252, %v251
    %v256 = vpack.c.b16 %v254, %v253
    %v260 = vsel %vm87, %v246, 0
    %262 = vmatpush.bf16.msra.mxu0 0
    %263 = vmatpush.bf16.msra.mxu0 0
    %264 = vmatpush.bf16.msra.mxu0 0
    %265 = vmatpush.bf16.msra.mxu0 0
    %266 = vmatpush.bf16.msra.mxu0 0
    %267 = vmatpush.bf16.msra.mxu0 0
    %268 = vmatpush.bf16.msra.mxu0 %v256
    %269 = vmatpush.bf16.msra.mxu0 %v255
    %270 = vmatmul.bf16.gmra.mxu0 %v260
    %v271 = vpop.f32.mrf.mxu0
    %v272 = vadd.f32 0.0, %v271
    %v273 = vpop.f32.mrf.mxu0
    %v274 = vadd.f32 0.0, %v273
    %275 = vdwg.mxu0
    %v276 = vunpack.c.l.bf16 %v60
    %v277 = vunpack.c.l.bf16 %v61
    %v278 = vmul.f32 %v272, %v276
    %v279 = vmul.f32 %v274, %v277
    %v280 = vunpack.c.l.bf16 %v240
    %v281 = vunpack.c.l.bf16 %v241
    %v282 = vadd.f32 %v280, %v278
    %v283 = vadd.f32 %v281, %v279
    %v284 = vpack.c.bf16 %v282, %v282
    %v285 = vpack.c.bf16 %v283, %v283
    %v286 = vunpack.c.l.bf16 %v232
    %v287 = vunpack.c.l.bf16 %v233
    %v288 = vmul.f32 %v286, %v236
    %v289 = vmul.f32 %v287, %v237
    %v290 = vpack.c.bf16 %v288, %v288
    %v291 = vpack.c.bf16 %v289, %v289
    %v294 = vunpack.c.l.b16 %v232
    %v295 = vunpack.c.l.b16 %v233
    %v296 = vpack.c.b16 %v295, %v294
    %v298 = vsel %vm87, %v296, 0
    %300 = vmatpush.bf16.msra.mxu0 0
    %301 = vmatpush.bf16.msra.mxu0 0
    %302 = vmatpush.bf16.msra.mxu0 0
    %303 = vmatpush.bf16.msra.mxu0 0
    %304 = vmatpush.bf16.msra.mxu0 0
    %305 = vmatpush.bf16.msra.mxu0 0
    %306 = vmatpush.bf16.msra.mxu0 %v256
    %307 = vmatpush.bf16.msra.mxu0 %v255
    %308 = vmatmul.bf16.gmra.mxu0 %v298
    %v309 = vpop.f32.mrf.mxu0
    %v310 = vadd.f32 0.0, %v309
    %v311 = vpop.f32.mrf.mxu0
    %v312 = vadd.f32 0.0, %v311
    %313 = vdwg.mxu0
    %v314 = vmul.f32 %v310, %v276
    %v315 = vmul.f32 %v312, %v277
    %v316 = vunpack.c.l.bf16 %v290
    %v317 = vunpack.c.l.bf16 %v291
    %v318 = vadd.f32 %v316, %v314
    %v319 = vadd.f32 %v317, %v315
    %v320 = vpack.c.bf16 %v318, %v318
    %v321 = vpack.c.bf16 %v319, %v319
    %v322 = vpack.c.bf16 %v226, %v226
    %v323 = vpack.c.bf16 %v228, %v228
    %v326 = vunpack.c.l.b16 %v284
    %v327 = vunpack.c.l.b16 %v285
    %v328 = vpack.c.b16 %v327, %v326
    %v331 = vunpack.c.l.b16 %v320
    %v332 = vunpack.c.l.b16 %v321
    %v333 = vpack.c.b16 %v332, %v331
    %vm334 = vcmask 130048
    %v336 = vsel %vm334, %v328, 0
    %v339 = vsel %vm334, %v333, 0
    %341 = vmatpush.bf16.xpose.msra.mxu0 0
    %342 = vmatpush.bf16.xpose.msra.mxu0 0
    %343 = vmatpush.bf16.xpose.msra.mxu0 0
    %344 = vmatpush.bf16.xpose.msra.mxu0 0
    %345 = vmatpush.bf16.xpose.msra.mxu0 0
    %346 = vmatpush.bf16.xpose.msra.mxu0 0
    %347 = vmatpush.bf16.xpose.msra.mxu0 0
    %348 = vmatpush.bf16.xpose.msra.mxu0 %v339
    %349 = vmatmul.bf16.gmra.mxu0 %v336
    %v350 = vpop.f32.mrf.mxu0
    %v351 = vadd.f32 %v66, %v350
    %v352 = vpop.f32.mrf.mxu0
    %v353 = vadd.f32 %v67, %v352
    %354 = vdwg.mxu0
    %v355 = vsel %vm334, %v351, -inf
    %356 = vmax.xlane.f32.xlu0 %v355
    %v357 = vpop.xlane.xlu0 %356
    %v358 = vsel %vm334, %v353, -inf
    %359 = vmax.xlane.f32.xlu0 %v358
    %v360 = vpop.xlane.xlu0 %359
    %v361 = vsub.f32 %v351, %v357
    %v362 = vsub.f32 %v353, %v360
    %v363 = vmul.f32 %v361, 1.442695
    %v364 = vpow.pop %v363
    %v365 = vmul.f32 %v362, 1.442695
    %v366 = vpow.pop %v365
    %v367 = vsel %vm334, %v364, 0.0
    %368 = vadd.xlane.f32.xlu0 %v367
    %v369 = vpop.xlane.xlu0 %368
    %v370 = vsel %vm334, %v366, 0.0
    %371 = vadd.xlane.f32.xlu0 %v370
    %v372 = vpop.xlane.xlu0 %371
    %v373 = vrcp.pop %v369
    %v374 = vrcp.pop %v372
    %v375 = vmul.f32 %v364, %v373
    %v376 = vmul.f32 %v366, %v374
    %v377 = vpack.c.bf16 %v376, %v375
    %v380 = vunpack.c.l.b16 %v322
    %v381 = vunpack.c.l.b16 %v323
    %v382 = vpack.c.b16 %v381, %v380
    %v385 = vsel %vm334, %v377, 0
    %387 = vmatpush.bf16.msra.mxu0 0
    %388 = vmatpush.bf16.msra.mxu0 0
    %389 = vmatpush.bf16.msra.mxu0 0
    %390 = vmatpush.bf16.msra.mxu0 0
    %391 = vmatpush.bf16.msra.mxu0 0
    %392 = vmatpush.bf16.msra.mxu0 0
    %393 = vmatpush.bf16.msra.mxu0 0
    %394 = vmatpush.bf16.msra.mxu0 %v382
    %395 = vmatmul.bf16.gmra.mxu0 %v385
    %v396 = vpop.f32.mrf.mxu0
    %v397 = vadd.f32 0.0, %v396
    %v398 = vpop.f32.mrf.mxu0
    %v399 = vadd.f32 0.0, %v398
    %400 = vdwg.mxu0
    %v401 = vpack.c.bf16 %v399, %v397
    %402 = vrot.lane.b32.xlu0 %v328, 112
    %v403 = vpop.permute.xlu0 %402
    %404 = vrot.lane.b32.xlu0 %v333, 112
    %v405 = vpop.permute.xlu0 %404
    %v407 = vsel %vm334, %v403, 0
    %v410 = vsel %vm334, %v405, 0
    %412 = vmatpush.bf16.xpose.msra.mxu0 0
    %413 = vmatpush.bf16.xpose.msra.mxu0 0
    %414 = vmatpush.bf16.xpose.msra.mxu0 0
    %415 = vmatpush.bf16.xpose.msra.mxu0 0
    %416 = vmatpush.bf16.xpose.msra.mxu0 0
    %417 = vmatpush.bf16.xpose.msra.mxu0 0
    %418 = vmatpush.bf16.xpose.msra.mxu0 0
    %419 = vmatpush.bf16.xpose.msra.mxu0 %v410
    %420 = vmatmul.bf16.gmra.mxu0 %v407
    %v421 = vpop.f32.mrf.mxu0
    %v422 = vadd.f32 %v66, %v421
    %v423 = vpop.f32.mrf.mxu0
    %v424 = vadd.f32 %v67, %v423
    %425 = vdwg.mxu0
    %v426 = vsel %vm334, %v422, -inf
    %427 = vmax.xlane.f32.xlu0 %v426
    %v428 = vpop.xlane.xlu0 %427
    %v429 = vsel %vm334, %v424, -inf
    %430 = vmax.xlane.f32.xlu0 %v429
    %v431 = vpop.xlane.xlu0 %430
    %v432 = vsub.f32 %v422, %v428
    %v433 = vsub.f32 %v424, %v431
    %v434 = vmul.f32 %v432, 1.442695
    %v435 = vpow.pop %v434
    %v436 = vmul.f32 %v433, 1.442695
    %v437 = vpow.pop %v436
    %v438 = vsel %vm334, %v435, 0.0
    %439 = vadd.xlane.f32.xlu0 %v438
    %v440 = vpop.xlane.xlu0 %439
    %v441 = vsel %vm334, %v437, 0.0
    %442 = vadd.xlane.f32.xlu0 %v441
    %v443 = vpop.xlane.xlu0 %442
    %v444 = vrcp.pop %v440
    %v445 = vrcp.pop %v443
    %v446 = vmul.f32 %v435, %v444
    %v447 = vmul.f32 %v437, %v445
    %v448 = vpack.c.bf16 %v447, %v446
    %449 = vrot.lane.b32.xlu0 %v382, 112
    %v450 = vpop.permute.xlu0 %449
    %v453 = vsel %vm334, %v448, 0
    %455 = vmatpush.bf16.msra.mxu0 0
    %456 = vmatpush.bf16.msra.mxu0 0
    %457 = vmatpush.bf16.msra.mxu0 0
    %458 = vmatpush.bf16.msra.mxu0 0
    %459 = vmatpush.bf16.msra.mxu0 0
    %460 = vmatpush.bf16.msra.mxu0 0
    %461 = vmatpush.bf16.msra.mxu0 0
    %462 = vmatpush.bf16.msra.mxu0 %v450
    %463 = vmatmul.bf16.gmra.mxu0 %v453
    %v464 = vpop.f32.mrf.mxu0
    %v465 = vadd.f32 0.0, %v464
    %v466 = vpop.f32.mrf.mxu0
    %v467 = vadd.f32 0.0, %v466
    %468 = vdwg.mxu0
    %v469 = vpack.c.bf16 %v467, %v465
    %v472 = vunpack.c.l.b16 %v85
    %v473 = vunpack.c.l.b16 %v86
    %v474 = vpack.c.b16 %v473, %v472
    %v477 = vsel %vm334, %v469, 0
    %479 = vmatpush.bf16.msra.mxu0 0
    %480 = vmatpush.bf16.msra.mxu0 0
    %481 = vmatpush.bf16.msra.mxu0 0
    %482 = vmatpush.bf16.msra.mxu0 0
    %483 = vmatpush.bf16.msra.mxu0 0
    %484 = vmatpush.bf16.msra.mxu0 0
    %485 = vmatpush.bf16.msra.mxu0 0
    %486 = vmatpush.bf16.msra.mxu0 %v474
    %487 = vmatmul.bf16.gmra.mxu0 %v477
    %v488 = vpop.f32.mrf.mxu0
    %v489 = vadd.f32 0.0, %v488
    %v490 = vpop.f32.mrf.mxu0
    %v491 = vadd.f32 0.0, %v490
    %492 = vdwg.mxu0
    %v495 = vunpack.c.l.b16 %v83
    %v496 = vunpack.c.l.b16 %v84
    %v497 = vpack.c.b16 %v496, %v495
    %v500 = vsel %vm334, %v401, 0
    %502 = vmatpush.bf16.msra.mxu0 0
    %503 = vmatpush.bf16.msra.mxu0 0
    %504 = vmatpush.bf16.msra.mxu0 0
    %505 = vmatpush.bf16.msra.mxu0 0
    %506 = vmatpush.bf16.msra.mxu0 0
    %507 = vmatpush.bf16.msra.mxu0 0
    %508 = vmatpush.bf16.msra.mxu0 0
    %509 = vmatpush.bf16.msra.mxu0 %v497
    %510 = vmatmul.bf16.gmra.mxu0 %v500
    %v511 = vpop.f32.mrf.mxu0
    %v512 = vadd.f32 %v489, %v511
    %v513 = vpop.f32.mrf.mxu0
    %v514 = vadd.f32 %v491, %v513
    %515 = vdwg.mxu0
    %v516 = vperm.slane %v68, 5
    %v517 = vadd.f32 %v512, %v516
    %v518 = vadd.f32 %v514, %v516
    %v519 = vadd.f32 %v517, %v56
    %v520 = vadd.f32 %v518, %v57
    %v521 = vsel %vm87, %v519, 0.0
    %522 = vadd.xlane.f32.xlu0 %v521
    %v523 = vpop.xlane.xlu0 %522
    %v524 = vsel %vm87, %v520, 0.0
    %525 = vadd.xlane.f32.xlu0 %v524
    %v526 = vpop.xlane.xlu0 %525
    %v527 = vmul.f32 %v523, %v100
    %v528 = vmul.f32 %v526, %v100
    %v529 = vsub.f32 %v519, %v527
    %v530 = vsub.f32 %v520, %v528
    %v531 = vmul.f32 %v529, %v529
    %v532 = vmul.f32 %v530, %v530
    %v533 = vsel %vm87, %v531, 0.0
    %534 = vadd.xlane.f32.xlu0 %v533
    %v535 = vpop.xlane.xlu0 %534
    %v536 = vsel %vm87, %v532, 0.0
    %537 = vadd.xlane.f32.xlu0 %v536
    %v538 = vpop.xlane.xlu0 %537
    %v539 = vmul.f32 %v535, %v100
    %v540 = vmul.f32 %v538, %v100
    %v541 = vadd.f32 %v539, 1e-05
    %v542 = vadd.f32 %v540, 1e-05
    %v543 = vrsqrt.pop %v541
    %v544 = vmul.f32 %v543, %v541
    %v545 = vmul.f32 %v544, %v543
    %v546 = vmul.f32 0.5, %v545
    %v547 = vsub.f32 1.5, %v546
    %v548 = vmul.f32 %v543, %v547
    %vm549 = vweird.f32 %v541
    %vm550 = vweird.f32 %v543
    %vm551 = vmor %vm549, %vm550
    %v552 = vsel %vm551, %v543, %v548
    %v553 = vrsqrt.pop %v542
    %v554 = vmul.f32 %v553, %v542
    %v555 = vmul.f32 %v554, %v553
    %v556 = vmul.f32 0.5, %v555
    %v557 = vsub.f32 1.5, %v556
    %v558 = vmul.f32 %v553, %v557
    %vm559 = vweird.f32 %v542
    %vm560 = vweird.f32 %v553
    %vm561 = vmor %vm559, %vm560
    %v562 = vsel %vm561, %v553, %v558
    %v563 = vmul.f32 %v529, %v552
    %v564 = vmul.f32 %v530, %v562
    %v565 = vperm.slane %v68, 6
    %v566 = vmul.f32 %v563, %v565
    %v567 = vmul.f32 %v564, %v565
    %v568 = vperm.slane %v68, 7
    %v569 = vadd.f32 %v566, %v568
    %v570 = vadd.f32 %v567, %v568
    %v571 = vpack.c.bf16 %v570, %v569
    %v572 = vld [vmem:[%s6] sm:$0xf]
    %v573 = vld [vmem:[%s6 + $0x4] sm:$0xf]
    %v574 = vld [vmem:[%s6 + $0x8] sm:$0xf]
    %v575 = vld [vmem:[%s6 + $0xc] sm:$0xf]
    %v577 = vperm.slane %v70, 0
    %v583 = vunpack.c.l.b16 %v572
    %v584 = vunpack.c.l.b16 %v573
    %v585 = vunpack.c.l.b16 %v574
    %v586 = vunpack.c.l.b16 %v575
    %v587 = vpack.c.b16 %v584, %v583
    %v588 = vpack.c.b16 %v586, %v585
    %v592 = vsel %vm87, %v571, 0
    %594 = vmatpush.bf16.msra.mxu0 0
    %595 = vmatpush.bf16.msra.mxu0 0
    %596 = vmatpush.bf16.msra.mxu0 0
    %597 = vmatpush.bf16.msra.mxu0 0
    %598 = vmatpush.bf16.msra.mxu0 0
    %599 = vmatpush.bf16.msra.mxu0 0
    %600 = vmatpush.bf16.msra.mxu0 %v588
    %601 = vmatpush.bf16.msra.mxu0 %v587
    %602 = vmatmul.bf16.gmra.mxu0 %v592
    %v603 = vpop.f32.mrf.mxu0
    %v604 = vadd.f32 %v577, %v603
    %v605 = vpop.f32.mrf.mxu0
    %v606 = vadd.f32 %v577, %v605
    %607 = vdwg.mxu0
    %v608 = vmul.f32 %v604, %v604
    %v609 = vmul.f32 %v606, %v606
    %v610 = vmul.f32 %v604, %v608
    %v611 = vmul.f32 %v606, %v609
    %v612 = vmul.f32 %v610, 0.044715
    %v613 = vmul.f32 %v611, 0.044715
    %v614 = vadd.f32 %v604, %v612
    %v615 = vadd.f32 %v606, %v613
    %v616 = vmul.f32 %v614, 0.7978846
    %v617 = vmul.f32 %v615, 0.7978846
    %v618 = vtanh.pop %v616
    %v619 = vtanh.pop %v617
    %v620 = vadd.f32 %v618, 1.0
    %v621 = vadd.f32 %v619, 1.0
    %v622 = vmul.f32 %v620, 0.5
    %v623 = vmul.f32 %v621, 0.5
    %v624 = vmul.f32 %v604, %v622
    %v625 = vmul.f32 %v606, %v623
    %v626 = vpack.c.bf16 %v625, %v624
    %v627 = vld [vmem:[%s7] sm:$0xf]
    %v628 = vld [vmem:[%s7 + $0x4] sm:$0xf]
    %v629 = vld [vmem:[%s7 + $0x8] sm:$0xf]
    %v630 = vld [vmem:[%s7 + $0xc] sm:$0xf]
    %v631 = vld [vmem:[%s7 + $0x10] sm:$0xf]
    %v632 = vld [vmem:[%s7 + $0x14] sm:$0xf]
    %v633 = vld [vmem:[%s7 + $0x18] sm:$0xf]
    %v634 = vld [vmem:[%s7 + $0x1c] sm:$0xf]
    %v635 = vperm.slane %v69, 0
    %v644 = vunpack.c.l.b16 %v627
    %v645 = vunpack.c.l.b16 %v628
    %v646 = vunpack.c.l.b16 %v629
    %v647 = vunpack.c.l.b16 %v630
    %v648 = vunpack.c.l.b16 %v631
    %v649 = vunpack.c.l.b16 %v632
    %v650 = vunpack.c.l.b16 %v633
    %v651 = vunpack.c.l.b16 %v634
    %v652 = vpack.c.b16 %v645, %v644
    %v653 = vpack.c.b16 %v647, %v646
    %v654 = vpack.c.b16 %v649, %v648
    %v655 = vpack.c.b16 %v651, %v650
    %vm660 = vcmask 523264
    %v662 = vsel %vm660, %v626, 0
    %664 = vmatpush.bf16.msra.mxu0 0
    %665 = vmatpush.bf16.msra.mxu0 0
    %666 = vmatpush.bf16.msra.mxu0 0
    %667 = vmatpush.bf16.msra.mxu0 0
    %668 = vmatpush.bf16.msra.mxu0 %v655
    %669 = vmatpush.bf16.msra.mxu0 %v654
    %670 = vmatpush.bf16.msra.mxu0 %v653
    %671 = vmatpush.bf16.msra.mxu0 %v652
    %672 = vmatmul.bf16.gmra.mxu0 %v662
    %v673 = vpop.f32.mrf.mxu0
    %v674 = vadd.f32 %v635, %v673
    %v675 = vpop.f32.mrf.mxu0
    %v676 = vadd.f32 %v635, %v675
    %677 = vdwg.mxu0
    %v678 = vadd.f32 %v674, %v519
    %v679 = vadd.f32 %v676, %v520
    %s680 = scalar_lea.vmem %s8, 16
    %v681 = vld [vmem:[%s680] sm:$0xff]
    %v682 = vld [vmem:[%s680 + $0x8] sm:$0x1]
    %s683 = scalar_lea.vmem %s9, 1
    %v684 = vld [vmem:[%s683] sm:$0x1]
    %s685 = scalar_lea.vmem [#allocation2], 64
    %v686 = vld [vmem:[%s685] sm:$0xf]
    %v687 = vld [vmem:[%s685 + $0x4] sm:$0xf]
    %v688 = vld [vmem:[%s685 + $0x8] sm:$0xf]
    %v689 = vld [vmem:[%s685 + $0xc] sm:$0xf]
    %v690 = vld [vmem:[%s685 + $0x10] sm:$0xf]
    %v691 = vld [vmem:[%s685 + $0x14] sm:$0xf]
    %v692 = vld [vmem:[%s685 + $0x18] sm:$0xf]
    %v693 = vld [vmem:[%s685 + $0x1c] sm:$0xf]
    %v694 = vld [vmem:[%s685 + $0x20] sm:$0xf]
    %v695 = vld [vmem:[%s685 + $0x24] sm:$0xf]
    %v696 = vld [vmem:[%s685 + $0x28] sm:$0xf]
    %v697 = vld [vmem:[%s685 + $0x2c] sm:$0xf]
    %v698 = vld [vmem:[%s685 + $0x30] sm:$0xf]
    %v699 = vld [vmem:[%s685 + $0x34] sm:$0xf]
    %v700 = vld [vmem:[%s685 + $0x38] sm:$0xf]
    %v701 = vld [vmem:[%s685 + $0x3c] sm:$0xf]
    %v702 = vsel %vm87, %v678, 0.0
    %703 = vadd.xlane.f32.xlu0 %v702
    %v704 = vpop.xlane.xlu0 %703
    %v705 = vsel %vm87, %v679, 0.0
    %706 = vadd.xlane.f32.xlu0 %v705
    %v707 = vpop.xlane.xlu0 %706
    %v708 = vmul.f32 %v704, %v100
    %v709 = vmul.f32 %v707, %v100
    %v710 = vsub.f32 %v678, %v708
    %v711 = vsub.f32 %v679, %v709
    %v712 = vmul.f32 %v710, %v710
    %v713 = vmul.f32 %v711, %v711
    %v714 = vsel %vm87, %v712, 0.0
    %715 = vadd.xlane.f32.xlu0 %v714
    %v716 = vpop.xlane.xlu0 %715
    %v717 = vsel %vm87, %v713, 0.0
    %718 = vadd.xlane.f32.xlu0 %v717
    %v719 = vpop.xlane.xlu0 %718
    %v720 = vmul.f32 %v716, %v100
    %v721 = vmul.f32 %v719, %v100
    %v722 = vadd.f32 %v720, 1e-05
    %v723 = vadd.f32 %v721, 1e-05
    %v724 = vrsqrt.pop %v722
    %v725 = vmul.f32 %v724, %v722
    %v726 = vmul.f32 %v725, %v724
    %v727 = vmul.f32 0.5, %v726
    %v728 = vsub.f32 1.5, %v727
    %v729 = vmul.f32 %v724, %v728
    %vm730 = vweird.f32 %v722
    %vm731 = vweird.f32 %v724
    %vm732 = vmor %vm730, %vm731
    %v733 = vsel %vm732, %v724, %v729
    %v734 = vrsqrt.pop %v723
    %v735 = vmul.f32 %v734, %v723
    %v736 = vmul.f32 %v735, %v734
    %v737 = vmul.f32 0.5, %v736
    %v738 = vsub.f32 1.5, %v737
    %v739 = vmul.f32 %v734, %v738
    %vm740 = vweird.f32 %v723
    %vm741 = vweird.f32 %v734
    %vm742 = vmor %vm740, %vm741
    %v743 = vsel %vm742, %v734, %v739
    %v744 = vmul.f32 %v710, %v733
    %v745 = vmul.f32 %v711, %v743
    %v746 = vperm.slane %v681, 0
    %v747 = vmul.f32 %v744, %v746
    %v748 = vmul.f32 %v745, %v746
    %v749 = vperm.slane %v681, 1
    %v750 = vadd.f32 %v747, %v749
    %v751 = vadd.f32 %v748, %v749
    %v752 = vpack.c.bf16 %v751, %v750
    %v753 = vperm.slane %v681, 2
    %v758 = vunpack.c.l.b16 %v686
    %v759 = vunpack.c.l.b16 %v687
    %v760 = vunpack.c.l.b16 %v688
    %v761 = vunpack.c.l.b16 %v689
    %v762 = vpack.c.b16 %v759, %v758
    %v763 = vpack.c.b16 %v761, %v760
    %v767 = vsel %vm87, %v752, 0
    %769 = vmatpush.bf16.msra.mxu0 0
    %770 = vmatpush.bf16.msra.mxu0 0
    %771 = vmatpush.bf16.msra.mxu0 0
    %772 = vmatpush.bf16.msra.mxu0 0
    %773 = vmatpush.bf16.msra.mxu0 0
    %774 = vmatpush.bf16.msra.mxu0 0
    %775 = vmatpush.bf16.msra.mxu0 %v763
    %776 = vmatpush.bf16.msra.mxu0 %v762
    %777 = vmatmul.bf16.gmra.mxu0 %v767
    %v778 = vpop.f32.mrf.mxu0
    %v779 = vadd.f32 %v753, %v778
    %v780 = vpop.f32.mrf.mxu0
    %v781 = vadd.f32 %v753, %v780
    %782 = vdwg.mxu0
    %v783 = vperm.slane %v681, 3
    %v788 = vunpack.c.l.b16 %v690
    %v789 = vunpack.c.l.b16 %v691
    %v790 = vunpack.c.l.b16 %v692
    %v791 = vunpack.c.l.b16 %v693
    %v792 = vpack.c.b16 %v789, %v788
    %v793 = vpack.c.b16 %v791, %v790
    %796 = vmatpush.bf16.msra.mxu0 0
    %797 = vmatpush.bf16.msra.mxu0 0
    %798 = vmatpush.bf16.msra.mxu0 0
    %799 = vmatpush.bf16.msra.mxu0 0
    %800 = vmatpush.bf16.msra.mxu0 0
    %801 = vmatpush.bf16.msra.mxu0 0
    %802 = vmatpush.bf16.msra.mxu0 %v793
    %803 = vmatpush.bf16.msra.mxu0 %v792
    %804 = vmatmul.bf16.gmra.mxu0 %v767
    %v805 = vpop.f32.mrf.mxu0
    %v806 = vadd.f32 %v783, %v805
    %v807 = vpop.f32.mrf.mxu0
    %v808 = vadd.f32 %v783, %v807
    %809 = vdwg.mxu0
    %v810 = vperm.slane %v681, 4
    %v815 = vunpack.c.l.b16 %v694
    %v816 = vunpack.c.l.b16 %v695
    %v817 = vunpack.c.l.b16 %v696
    %v818 = vunpack.c.l.b16 %v697
    %v819 = vpack.c.b16 %v816, %v815
    %v820 = vpack.c.b16 %v818, %v817
    %823 = vmatpush.bf16.msra.mxu0 0
    %824 = vmatpush.bf16.msra.mxu0 0
    %825 = vmatpush.bf16.msra.mxu0 0
    %826 = vmatpush.bf16.msra.mxu0 0
    %827 = vmatpush.bf16.msra.mxu0 0
    %828 = vmatpush.bf16.msra.mxu0 0
    %829 = vmatpush.bf16.msra.mxu0 %v820
    %830 = vmatpush.bf16.msra.mxu0 %v819
    %831 = vmatmul.bf16.gmra.mxu0 %v767
    %v832 = vpop.f32.mrf.mxu0
    %v833 = vadd.f32 %v810, %v832
    %v834 = vpop.f32.mrf.mxu0
    %v835 = vadd.f32 %v810, %v834
    %836 = vdwg.mxu0
    %v837 = vpack.c.bf16 %v779, %v779
    %v838 = vpack.c.bf16 %v781, %v781
    %v839 = vpack.c.bf16 %v806, %v806
    %v840 = vpack.c.bf16 %v808, %v808
    %v841 = vunpack.c.l.bf16 %v837
    %v842 = vunpack.c.l.bf16 %v838
    %v843 = vmul.f32 %v841, %v236
    %v844 = vmul.f32 %v842, %v237
    %v845 = vpack.c.bf16 %v843, %v843
    %v846 = vpack.c.bf16 %v844, %v844
    %v849 = vunpack.c.l.b16 %v837
    %v850 = vunpack.c.l.b16 %v838
    %v851 = vpack.c.b16 %v850, %v849
    %v853 = vsel %vm87, %v851, 0
    %855 = vmatpush.bf16.msra.mxu0 0
    %856 = vmatpush.bf16.msra.mxu0 0
    %857 = vmatpush.bf16.msra.mxu0 0
    %858 = vmatpush.bf16.msra.mxu0 0
    %859 = vmatpush.bf16.msra.mxu0 0
    %860 = vmatpush.bf16.msra.mxu0 0
    %861 = vmatpush.bf16.msra.mxu0 %v256
    %862 = vmatpush.bf16.msra.mxu0 %v255
    %863 = vmatmul.bf16.gmra.mxu0 %v853
    %v864 = vpop.f32.mrf.mxu0
    %v865 = vadd.f32 0.0, %v864
    %v866 = vpop.f32.mrf.mxu0
    %v867 = vadd.f32 0.0, %v866
    %868 = vdwg.mxu0
    %v869 = vmul.f32 %v865, %v276
    %v870 = vmul.f32 %v867, %v277
    %v871 = vunpack.c.l.bf16 %v845
    %v872 = vunpack.c.l.bf16 %v846
    %v873 = vadd.f32 %v871, %v869
    %v874 = vadd.f32 %v872, %v870
    %v875 = vpack.c.bf16 %v873, %v873
    %v876 = vpack.c.bf16 %v874, %v874
    %v877 = vunpack.c.l.bf16 %v839
    %v878 = vunpack.c.l.bf16 %v840
    %v879 = vmul.f32 %v877, %v236
    %v880 = vmul.f32 %v878, %v237
    %v881 = vpack.c.bf16 %v879, %v879
    %v882 = vpack.c.bf16 %v880, %v880
    %v885 = vunpack.c.l.b16 %v839
    %v886 = vunpack.c.l.b16 %v840
    %v887 = vpack.c.b16 %v886, %v885
    %v889 = vsel %vm87, %v887, 0
    %891 = vmatpush.bf16.msra.mxu0 0
    %892 = vmatpush.bf16.msra.mxu0 0
    %893 = vmatpush.bf16.msra.mxu0 0
    %894 = vmatpush.bf16.msra.mxu0 0
    %895 = vmatpush.bf16.msra.mxu0 0
    %896 = vmatpush.bf16.msra.mxu0 0
    %897 = vmatpush.bf16.msra.mxu0 %v256
    %898 = vmatpush.bf16.msra.mxu0 %v255
    %899 = vmatmul.bf16.gmra.mxu0 %v889
    %v900 = vpop.f32.mrf.mxu0
    %v901 = vadd.f32 0.0, %v900
    %v902 = vpop.f32.mrf.mxu0
    %v903 = vadd.f32 0.0, %v902
    %904 = vdwg.mxu0
    %v905 = vmul.f32 %v901, %v276
    %v906 = vmul.f32 %v903, %v277
    %v907 = vunpack.c.l.bf16 %v881
    %v908 = vunpack.c.l.bf16 %v882
    %v909 = vadd.f32 %v907, %v905
    %v910 = vadd.f32 %v908, %v906
    %v911 = vpack.c.bf16 %v909, %v909
    %v912 = vpack.c.bf16 %v910, %v910
    %v913 = vpack.c.bf16 %v833, %v833
    %v914 = vpack.c.bf16 %v835, %v835
    %v917 = vunpack.c.l.b16 %v875
    %v918 = vunpack.c.l.b16 %v876
    %v919 = vpack.c.b16 %v918, %v917
    %v922 = vunpack.c.l.b16 %v911
    %v923 = vunpack.c.l.b16 %v912
    %v924 = vpack.c.b16 %v923, %v922
    %v926 = vsel %vm334, %v919, 0
    %v929 = vsel %vm334, %v924, 0
    %931 = vmatpush.bf16.xpose.msra.mxu0 0
    %932 = vmatpush.bf16.xpose.msra.mxu0 0
    %933 = vmatpush.bf16.xpose.msra.mxu0 0
    %934 = vmatpush.bf16.xpose.msra.mxu0 0
    %935 = vmatpush.bf16.xpose.msra.mxu0 0
    %936 = vmatpush.bf16.xpose.msra.mxu0 0
    %937 = vmatpush.bf16.xpose.msra.mxu0 0
    %938 = vmatpush.bf16.xpose.msra.mxu0 %v929
    %939 = vmatmul.bf16.gmra.mxu0 %v926
    %v940 = vpop.f32.mrf.mxu0
    %v941 = vadd.f32 %v66, %v940
    %v942 = vpop.f32.mrf.mxu0
    %v943 = vadd.f32 %v67, %v942
    %944 = vdwg.mxu0
    %v945 = vsel %vm334, %v941, -inf
    %946 = vmax.xlane.f32.xlu0 %v945
    %v947 = vpop.xlane.xlu0 %946
    %v948 = vsel %vm334, %v943, -inf
    %949 = vmax.xlane.f32.xlu0 %v948
    %v950 = vpop.xlane.xlu0 %949
    %v951 = vsub.f32 %v941, %v947
    %v952 = vsub.f32 %v943, %v950
    %v953 = vmul.f32 %v951, 1.442695
    %v954 = vpow.pop %v953
    %v955 = vmul.f32 %v952, 1.442695
    %v956 = vpow.pop %v955
    %v957 = vsel %vm334, %v954, 0.0
    %958 = vadd.xlane.f32.xlu0 %v957
    %v959 = vpop.xlane.xlu0 %958
    %v960 = vsel %vm334, %v956, 0.0
    %961 = vadd.xlane.f32.xlu0 %v960
    %v962 = vpop.xlane.xlu0 %961
    %v963 = vrcp.pop %v959
    %v964 = vrcp.pop %v962
    %v965 = vmul.f32 %v954, %v963
    %v966 = vmul.f32 %v956, %v964
    %v967 = vpack.c.bf16 %v966, %v965
    %v970 = vunpack.c.l.b16 %v913
    %v971 = vunpack.c.l.b16 %v914
    %v972 = vpack.c.b16 %v971, %v970
    %v975 = vsel %vm334, %v967, 0
    %977 = vmatpush.bf16.msra.mxu0 0
    %978 = vmatpush.bf16.msra.mxu0 0
    %979 = vmatpush.bf16.msra.mxu0 0
    %980 = vmatpush.bf16.msra.mxu0 0
    %981 = vmatpush.bf16.msra.mxu0 0
    %982 = vmatpush.bf16.msra.mxu0 0
    %983 = vmatpush.bf16.msra.mxu0 0
    %984 = vmatpush.bf16.msra.mxu0 %v972
    %985 = vmatmul.bf16.gmra.mxu0 %v975
    %v986 = vpop.f32.mrf.mxu0
    %v987 = vadd.f32 0.0, %v986
    %v988 = vpop.f32.mrf.mxu0
    %v989 = vadd.f32 0.0, %v988
    %990 = vdwg.mxu0
    %v991 = vpack.c.bf16 %v989, %v987
    %992 = vrot.lane.b32.xlu0 %v919, 112
    %v993 = vpop.permute.xlu0 %992
    %994 = vrot.lane.b32.xlu0 %v924, 112
    %v995 = vpop.permute.xlu0 %994
    %v997 = vsel %vm334, %v993, 0
    %v1000 = vsel %vm334, %v995, 0
    %1002 = vmatpush.bf16.xpose.msra.mxu0 0
    %1003 = vmatpush.bf16.xpose.msra.mxu0 0
    %1004 = vmatpush.bf16.xpose.msra.mxu0 0
    %1005 = vmatpush.bf16.xpose.msra.mxu0 0
    %1006 = vmatpush.bf16.xpose.msra.mxu0 0
    %1007 = vmatpush.bf16.xpose.msra.mxu0 0
    %1008 = vmatpush.bf16.xpose.msra.mxu0 0
    %1009 = vmatpush.bf16.xpose.msra.mxu0 %v1000
    %1010 = vmatmul.bf16.gmra.mxu0 %v997
    %v1011 = vpop.f32.mrf.mxu0
    %v1012 = vadd.f32 %v66, %v1011
    %v1013 = vpop.f32.mrf.mxu0
    %v1014 = vadd.f32 %v67, %v1013
    %1015 = vdwg.mxu0
    %v1016 = vsel %vm334, %v1012, -inf
    %1017 = vmax.xlane.f32.xlu0 %v1016
    %v1018 = vpop.xlane.xlu0 %1017
    %v1019 = vsel %vm334, %v1014, -inf
    %1020 = vmax.xlane.f32.xlu0 %v1019
    %v1021 = vpop.xlane.xlu0 %1020
    %v1022 = vsub.f32 %v1012, %v1018
    %v1023 = vsub.f32 %v1014, %v1021
    %v1024 = vmul.f32 %v1022, 1.442695
    %v1025 = vpow.pop %v1024
    %v1026 = vmul.f32 %v1023, 1.442695
    %v1027 = vpow.pop %v1026
    %v1028 = vsel %vm334, %v1025, 0.0
    %1029 = vadd.xlane.f32.xlu0 %v1028
    %v1030 = vpop.xlane.xlu0 %1029
    %v1031 = vsel %vm334, %v1027, 0.0
    %1032 = vadd.xlane.f32.xlu0 %v1031
    %v1033 = vpop.xlane.xlu0 %1032
    %v1034 = vrcp.pop %v1030
    %v1035 = vrcp.pop %v1033
    %v1036 = vmul.f32 %v1025, %v1034
    %v1037 = vmul.f32 %v1027, %v1035
    %v1038 = vpack.c.bf16 %v1037, %v1036
    %1039 = vrot.lane.b32.xlu0 %v972, 112
    %v1040 = vpop.permute.xlu0 %1039
    %v1043 = vsel %vm334, %v1038, 0
    %1045 = vmatpush.bf16.msra.mxu0 0
    %1046 = vmatpush.bf16.msra.mxu0 0
    %1047 = vmatpush.bf16.msra.mxu0 0
    %1048 = vmatpush.bf16.msra.mxu0 0
    %1049 = vmatpush.bf16.msra.mxu0 0
    %1050 = vmatpush.bf16.msra.mxu0 0
    %1051 = vmatpush.bf16.msra.mxu0 0
    %1052 = vmatpush.bf16.msra.mxu0 %v1040
    %1053 = vmatmul.bf16.gmra.mxu0 %v1043
    %v1054 = vpop.f32.mrf.mxu0
    %v1055 = vadd.f32 0.0, %v1054
    %v1056 = vpop.f32.mrf.mxu0
    %v1057 = vadd.f32 0.0, %v1056
    %1058 = vdwg.mxu0
    %v1059 = vpack.c.bf16 %v1057, %v1055
    %v1062 = vunpack.c.l.b16 %v700
    %v1063 = vunpack.c.l.b16 %v701
    %v1064 = vpack.c.b16 %v1063, %v1062
    %v1067 = vsel %vm334, %v1059, 0
    %1069 = vmatpush.bf16.msra.mxu0 0
    %1070 = vmatpush.bf16.msra.mxu0 0
    %1071 = vmatpush.bf16.msra.mxu0 0
    %1072 = vmatpush.bf16.msra.mxu0 0
    %1073 = vmatpush.bf16.msra.mxu0 0
    %1074 = vmatpush.bf16.msra.mxu0 0
    %1075 = vmatpush.bf16.msra.mxu0 0
    %1076 = vmatpush.bf16.msra.mxu0 %v1064
    %1077 = vmatmul.bf16.gmra.mxu0 %v1067
    %v1078 = vpop.f32.mrf.mxu0
    %v1079 = vadd.f32 0.0, %v1078
    %v1080 = vpop.f32.mrf.mxu0
    %v1081 = vadd.f32 0.0, %v1080
    %1082 = vdwg.mxu0
    %v1085 = vunpack.c.l.b16 %v698
    %v1086 = vunpack.c.l.b16 %v699
    %v1087 = vpack.c.b16 %v1086, %v1085
    %v1090 = vsel %vm334, %v991, 0
    %1092 = vmatpush.bf16.msra.mxu0 0
    %1093 = vmatpush.bf16.msra.mxu0 0
    %1094 = vmatpush.bf16.msra.mxu0 0
    %1095 = vmatpush.bf16.msra.mxu0 0
    %1096 = vmatpush.bf16.msra.mxu0 0
    %1097 = vmatpush.bf16.msra.mxu0 0
    %1098 = vmatpush.bf16.msra.mxu0 0
    %1099 = vmatpush.bf16.msra.mxu0 %v1087
    %1100 = vmatmul.bf16.gmra.mxu0 %v1090
    %v1101 = vpop.f32.mrf.mxu0
    %v1102 = vadd.f32 %v1079, %v1101
    %v1103 = vpop.f32.mrf.mxu0
    %v1104 = vadd.f32 %v1081, %v1103
    %1105 = vdwg.mxu0
    %v1106 = vperm.slane %v681, 5
    %v1107 = vadd.f32 %v1102, %v1106
    %v1108 = vadd.f32 %v1104, %v1106
    %v1109 = vadd.f32 %v1107, %v678
    %v1110 = vadd.f32 %v1108, %v679
    %v1111 = vsel %vm87, %v1109, 0.0
    %1112 = vadd.xlane.f32.xlu0 %v1111
    %v1113 = vpop.xlane.xlu0 %1112
    %v1114 = vsel %vm87, %v1110, 0.0
    %1115 = vadd.xlane.f32.xlu0 %v1114
    %v1116 = vpop.xlane.xlu0 %1115
    %v1117 = vmul.f32 %v1113, %v100
    %v1118 = vmul.f32 %v1116, %v100
    %v1119 = vsub.f32 %v1109, %v1117
    %v1120 = vsub.f32 %v1110, %v1118
    %v1121 = vmul.f32 %v1119, %v1119
    %v1122 = vmul.f32 %v1120, %v1120
    %v1123 = vsel %vm87, %v1121, 0.0
    %1124 = vadd.xlane.f32.xlu0 %v1123
    %v1125 = vpop.xlane.xlu0 %1124
    %v1126 = vsel %vm87, %v1122, 0.0
    %1127 = vadd.xlane.f32.xlu0 %v1126
    %v1128 = vpop.xlane.xlu0 %1127
    %v1129 = vmul.f32 %v1125, %v100
    %v1130 = vmul.f32 %v1128, %v100
    %v1131 = vadd.f32 %v1129, 1e-05
    %v1132 = vadd.f32 %v1130, 1e-05
    %v1133 = vrsqrt.pop %v1131
    %v1134 = vmul.f32 %v1133, %v1131
    %v1135 = vmul.f32 %v1134, %v1133
    %v1136 = vmul.f32 0.5, %v1135
    %v1137 = vsub.f32 1.5, %v1136
    %v1138 = vmul.f32 %v1133, %v1137
    %vm1139 = vweird.f32 %v1131
    %vm1140 = vweird.f32 %v1133
    %vm1141 = vmor %vm1139, %vm1140
    %v1142 = vsel %vm1141, %v1133, %v1138
    %v1143 = vrsqrt.pop %v1132
    %v1144 = vmul.f32 %v1143, %v1132
    %v1145 = vmul.f32 %v1144, %v1143
    %v1146 = vmul.f32 0.5, %v1145
    %v1147 = vsub.f32 1.5, %v1146
    %v1148 = vmul.f32 %v1143, %v1147
    %vm1149 = vweird.f32 %v1132
    %vm1150 = vweird.f32 %v1143
    %vm1151 = vmor %vm1149, %vm1150
    %v1152 = vsel %vm1151, %v1143, %v1148
    %v1153 = vmul.f32 %v1119, %v1142
    %v1154 = vmul.f32 %v1120, %v1152
    %v1155 = vperm.slane %v681, 6
    %v1156 = vmul.f32 %v1153, %v1155
    %v1157 = vmul.f32 %v1154, %v1155
    %v1158 = vperm.slane %v681, 7
    %v1159 = vadd.f32 %v1156, %v1158
    %v1160 = vadd.f32 %v1157, %v1158
    %v1161 = vpack.c.bf16 %v1160, %v1159
    %s1162 = scalar_lea.vmem %s6, 16
    %v1163 = vld [vmem:[%s1162] sm:$0xf]
    %v1164 = vld [vmem:[%s1162 + $0x4] sm:$0xf]
    %v1165 = vld [vmem:[%s1162 + $0x8] sm:$0xf]
    %v1166 = vld [vmem:[%s1162 + $0xc] sm:$0xf]
    %v1168 = vperm.slane %v684, 0
    %v1174 = vunpack.c.l.b16 %v1163
    %v1175 = vunpack.c.l.b16 %v1164
    %v1176 = vunpack.c.l.b16 %v1165
    %v1177 = vunpack.c.l.b16 %v1166
    %v1178 = vpack.c.b16 %v1175, %v1174
    %v1179 = vpack.c.b16 %v1177, %v1176
    %v1183 = vsel %vm87, %v1161, 0
    %1185 = vmatpush.bf16.msra.mxu0 0
    %1186 = vmatpush.bf16.msra.mxu0 0
    %1187 = vmatpush.bf16.msra.mxu0 0
    %1188 = vmatpush.bf16.msra.mxu0 0
    %1189 = vmatpush.bf16.msra.mxu0 0
    %1190 = vmatpush.bf16.msra.mxu0 0
    %1191 = vmatpush.bf16.msra.mxu0 %v1179
    %1192 = vmatpush.bf16.msra.mxu0 %v1178
    %1193 = vmatmul.bf16.gmra.mxu0 %v1183
    %v1194 = vpop.f32.mrf.mxu0
    %v1195 = vadd.f32 %v1168, %v1194
    %v1196 = vpop.f32.mrf.mxu0
    %v1197 = vadd.f32 %v1168, %v1196
    %1198 = vdwg.mxu0
    %v1199 = vmul.f32 %v1195, %v1195
    %v1200 = vmul.f32 %v1197, %v1197
    %v1201 = vmul.f32 %v1195, %v1199
    %v1202 = vmul.f32 %v1197, %v1200
    %v1203 = vmul.f32 %v1201, 0.044715
    %v1204 = vmul.f32 %v1202, 0.044715
    %v1205 = vadd.f32 %v1195, %v1203
    %v1206 = vadd.f32 %v1197, %v1204
    %v1207 = vmul.f32 %v1205, 0.7978846
    %v1208 = vmul.f32 %v1206, 0.7978846
    %v1209 = vtanh.pop %v1207
    %v1210 = vtanh.pop %v1208
    %v1211 = vadd.f32 %v1209, 1.0
    %v1212 = vadd.f32 %v1210, 1.0
    %v1213 = vmul.f32 %v1211, 0.5
    %v1214 = vmul.f32 %v1212, 0.5
    %v1215 = vmul.f32 %v1195, %v1213
    %v1216 = vmul.f32 %v1197, %v1214
    %v1217 = vpack.c.bf16 %v1216, %v1215
    %s1218 = scalar_lea.vmem %s7, 32
    %v1219 = vld [vmem:[%s1218] sm:$0xf]
    %v1220 = vld [vmem:[%s1218 + $0x4] sm:$0xf]
    %v1221 = vld [vmem:[%s1218 + $0x8] sm:$0xf]
    %v1222 = vld [vmem:[%s1218 + $0xc] sm:$0xf]
    %v1223 = vld [vmem:[%s1218 + $0x10] sm:$0xf]
    %v1224 = vld [vmem:[%s1218 + $0x14] sm:$0xf]
    %v1225 = vld [vmem:[%s1218 + $0x18] sm:$0xf]
    %v1226 = vld [vmem:[%s1218 + $0x1c] sm:$0xf]
    %v1227 = vperm.slane %v682, 0
    %v1236 = vunpack.c.l.b16 %v1219
    %v1237 = vunpack.c.l.b16 %v1220
    %v1238 = vunpack.c.l.b16 %v1221
    %v1239 = vunpack.c.l.b16 %v1222
    %v1240 = vunpack.c.l.b16 %v1223
    %v1241 = vunpack.c.l.b16 %v1224
    %v1242 = vunpack.c.l.b16 %v1225
    %v1243 = vunpack.c.l.b16 %v1226
    %v1244 = vpack.c.b16 %v1237, %v1236
    %v1245 = vpack.c.b16 %v1239, %v1238
    %v1246 = vpack.c.b16 %v1241, %v1240
    %v1247 = vpack.c.b16 %v1243, %v1242
    %v1253 = vsel %vm660, %v1217, 0
    %1255 = vmatpush.bf16.msra.mxu0 0
    %1256 = vmatpush.bf16.msra.mxu0 0
    %1257 = vmatpush.bf16.msra.mxu0 0
    %1258 = vmatpush.bf16.msra.mxu0 0
    %1259 = vmatpush.bf16.msra.mxu0 %v1247
    %1260 = vmatpush.bf16.msra.mxu0 %v1246
    %1261 = vmatpush.bf16.msra.mxu0 %v1245
    %1262 = vmatpush.bf16.msra.mxu0 %v1244
    %1263 = vmatmul.bf16.gmra.mxu0 %v1253
    %v1264 = vpop.f32.mrf.mxu0
    %v1265 = vadd.f32 %v1227, %v1264
    %v1266 = vpop.f32.mrf.mxu0
    %v1267 = vadd.f32 %v1227, %v1266
    %1268 = vdwg.mxu0
    %v1269 = vadd.f32 %v1265, %v1109
    %v1270 = vadd.f32 %v1267, %v1110
    %v1271 = vld [vmem:[%s10] sm:$0x3]
    %v1272 = vsel %vm87, %v1269, 0.0
    %1273 = vadd.xlane.f32.xlu0 %v1272
    %v1274 = vpop.xlane.xlu0 %1273
    %v1275 = vsel %vm87, %v1270, 0.0
    %1276 = vadd.xlane.f32.xlu0 %v1275
    %v1277 = vpop.xlane.xlu0 %1276
    %v1278 = vmul.f32 %v1274, %v100
    %v1279 = vmul.f32 %v1277, %v100
    %v1280 = vsub.f32 %v1269, %v1278
    %v1281 = vsub.f32 %v1270, %v1279
    %v1282 = vmul.f32 %v1280, %v1280
    %v1283 = vmul.f32 %v1281, %v1281
    %v1284 = vsel %vm87, %v1282, 0.0
    %1285 = vadd.xlane.f32.xlu0 %v1284
    %v1286 = vpop.xlane.xlu0 %1285
    %v1287 = vsel %vm87, %v1283, 0.0
    %1288 = vadd.xlane.f32.xlu0 %v1287
    %v1289 = vpop.xlane.xlu0 %1288
    %v1290 = vmul.f32 %v1286, %v100
    %v1291 = vmul.f32 %v1289, %v100
    %v1292 = vadd.f32 %v1290, 1e-05
    %v1293 = vadd.f32 %v1291, 1e-05
    %v1294 = vrsqrt.pop %v1292
    %v1295 = vmul.f32 %v1294, %v1292
    %v1296 = vmul.f32 %v1295, %v1294
    %v1297 = vmul.f32 0.5, %v1296
    %v1298 = vsub.f32 1.5, %v1297
    %v1299 = vmul.f32 %v1294, %v1298
    %vm1300 = vweird.f32 %v1292
    %vm1301 = vweird.f32 %v1294
    %vm1302 = vmor %vm1300, %vm1301
    %v1303 = vsel %vm1302, %v1294, %v1299
    %v1304 = vrsqrt.pop %v1293
    %v1305 = vmul.f32 %v1304, %v1293
    %v1306 = vmul.f32 %v1305, %v1304
    %v1307 = vmul.f32 0.5, %v1306
    %v1308 = vsub.f32 1.5, %v1307
    %v1309 = vmul.f32 %v1304, %v1308
    %vm1310 = vweird.f32 %v1293
    %vm1311 = vweird.f32 %v1304
    %vm1312 = vmor %vm1310, %vm1311
    %v1313 = vsel %vm1312, %v1304, %v1309
    %v1314 = vmul.f32 %v1280, %v1303
    %v1315 = vmul.f32 %v1281, %v1313
    %v1316 = vperm.slane %v1271, 0
    %v1317 = vmul.f32 %v1314, %v1316
    %v1318 = vmul.f32 %v1315, %v1316
    %v1319 = vperm.slane %v1271, 1
    %v1320 = vadd.f32 %v1317, %v1319
    %v1321 = vadd.f32 %v1318, %v1319
    %1322 = vst.msk [vmem:[#allocation5] sm:$0xff] %vm87, %v1320
    %1323 = vst.msk [vmem:[#allocation5 + $0x8] sm:$0xff] %vm87, %v1321
    // Predicated region
    $region50: #{tpu_custom_call.1} parent=1 // pred_check
      _
    $region51: #{tpu_custom_call.1} parent=1 // pred_check_branch
      %1325 = sbr.rel (0) target = $region53
    $region52: #{tpu_custom_call.1} parent=1 // pred_region
      %1327 = vsyncadd [#allocation4], 0
      %s1328 = sshll.u32 [#allocation5], 4
      %s1329 = int_to_ptr.vmem [resolvable:$true] %s1328
      %s1330 = sshll.u32 %s11, 4
      %s1331 = int_to_ptr.hbm [resolvable:$true] %s1330
      %1336 = dma.vmem_to_hbm [thread:$0]  %s1329, 256, %s1331, [#allocation4], 128, 128, 8
    $region53: #{tpu_custom_call.1} parent=1 // pred_fallthru
      _
    // Predicated region
    $region54: #{tpu_custom_call.1} parent=1 // pred_check
      _
    $region55: #{tpu_custom_call.1} parent=1 // pred_check_branch
      %1338 = sbr.rel (0) target = $region57
    $region56: #{tpu_custom_call.1} parent=1 // pred_region
      %1340 = dma.done [#allocation4], 256
    $region57: #{tpu_custom_call.1} parent=1 // pred_fallthru
      _
    %1341 = vsyncpa [#allocation3], 1
    %1342 = vsyncpa [#allocation4], 1

</llo_original>
